<compile_context>
chip_gen: v6e
topology: v6e:2x2x1
jax: 0.10.0
libtpu: 0.0.40
codegen_flags: <defaults>
</compile_context>

<pallas_src>
import functools

import jax
import jax.numpy as jnp
import numpy as np
from jax.experimental import pallas as pl
from jax.experimental.pallas import tpu as pltpu


def _arg_loss_kernel(nvalid_ref, lab_ref, trig_ref, x_ref, w_ref, unseen_ref,
                     loss_ref, sum_ref, cnt_ref, *, args_num):
    i = pl.program_id(0)

    @pl.when(i == 0)
    def _():
        sum_ref[...] = jnp.zeros_like(sum_ref)
        cnt_ref[...] = jnp.zeros_like(cnt_ref)

    tile_n = x_ref.shape[0]
    a_pad = w_ref.shape[1]
    ntrig_pad = unseen_ref.shape[0]

    # classifier (Linear, bias=False): logits = x @ W^T  -- MXU, bf16 in / f32 acc
    logits = jnp.dot(x_ref[...], w_ref[...], preferred_element_type=jnp.float32)

    col = jax.lax.broadcasted_iota(jnp.int32, (tile_n, a_pad), 1)

    # per-row unseen-arg mask: one-hot(trigger) @ unseen_table  (tiny MXU matmul,
    # avoids any dynamic gather and any [N, A_PAD] mask in HBM)
    trig = trig_ref[...]                                            # [tile_n, 1] i32
    trig_oh = (jax.lax.broadcasted_iota(jnp.int32, (tile_n, ntrig_pad), 1)
               == trig).astype(jnp.float32)
    unseen = jnp.dot(trig_oh, unseen_ref[...],
                     preferred_element_type=jnp.float32)            # [tile_n, a_pad]

    # logits[:, unseen_args] = 0 ; padded class columns -> -1e30 (excluded)
    final = jnp.where(unseen > 0.5, 0.0, logits)
    final = jnp.where(col >= args_num, -1e30, final)

    # row validity derived in-kernel from row iota vs. prefetched scalar N
    row = jax.lax.broadcasted_iota(jnp.int32, (tile_n, 1), 0) + i * tile_n
    valid = (row < nvalid_ref[0]).astype(jnp.float32)               # [tile_n, 1]

    # cross-entropy per row (f32 throughout)
    m = jnp.max(final, axis=-1, keepdims=True)
    lse = m + jnp.log(jnp.sum(jnp.exp(final - m), axis=-1, keepdims=True))
    label = lab_ref[...]                                            # [tile_n, 1] i32
    picked = jnp.sum(jnp.where(col == label, final, 0.0), axis=-1, keepdims=True)
    per_row = (lse - picked) * valid

    sum_ref[...] = sum_ref[...] + jnp.sum(per_row)
    cnt_ref[...] = cnt_ref[...] + jnp.sum(valid)

    @pl.when(i == pl.num_programs(0) - 1)
    def _():
        val = sum_ref[...] / jnp.maximum(cnt_ref[...], 1.0)
        loss_ref[0, 0] = val[0, 0]


def argument_detection_loss(n_valid, labels_col, trig_col, x, w_t, unseen_tab,
                            *, args_num, tile_n=128):
    """n_valid:[1]i32  labels_col/trig_col:[N_pad,1]i32  x:[N_pad,2H]bf16
    w_t:[2H,A_pad]bf16  unseen_tab:[NTRIG_pad,A_pad]f32  ->  loss [1,1] f32."""
    n_pad, two_h = x.shape
    a_pad = w_t.shape[1]
    ntrig_pad = unseen_tab.shape[0]
    assert n_pad % tile_n == 0
    grid = (n_pad // tile_n,)

    kernel = functools.partial(_arg_loss_kernel, args_num=args_num)

    return pl.pallas_call(
        kernel,
        out_shape=jax.ShapeDtypeStruct((1, 1), jnp.float32),
        grid_spec=pltpu.PrefetchScalarGridSpec(
            num_scalar_prefetch=1,
            grid=grid,
            in_specs=[
                pl.BlockSpec((tile_n, 1), lambda i, n: (i, 0)),       # labels
                pl.BlockSpec((tile_n, 1), lambda i, n: (i, 0)),       # trigger ids
                pl.BlockSpec((tile_n, two_h), lambda i, n: (i, 0)),   # x tile
                pl.BlockSpec((two_h, a_pad), lambda i, n: (0, 0)),    # W^T (resident)
                pl.BlockSpec((ntrig_pad, a_pad), lambda i, n: (0, 0)),# unseen table
            ],
            out_specs=pl.BlockSpec(memory_space=pltpu.MemorySpace.SMEM),
            scratch_shapes=[pltpu.VMEM((1, 1), jnp.float32),
                            pltpu.VMEM((1, 1), jnp.float32)],
        ),
        compiler_params=pltpu.CompilerParams(
            dimension_semantics=("arbitrary",)),
    )(n_valid, labels_col, trig_col, x, w_t, unseen_tab)


def reference_loss(seq, batch_idx, starts, ends, labels, trigger, unseen_md, W):
    """Plain-JAX replica of the PyTorch forward (post-BERT) for checking.
    The matmul inputs are routed through bf16 to mirror the kernel's MXU dtype."""
    rows, labs = [], []
    w_bf = W.astype(jnp.bfloat16).astype(jnp.float32)
    for n in range(len(batch_idx)):
        b, s, e = int(batch_idx[n]), int(starts[n]), int(ends[n])
        emb = jnp.concatenate([seq[b, s + 1], seq[b, e]])             # [2H]
        emb_bf = emb.astype(jnp.bfloat16).astype(jnp.float32)
        logit = emb_bf @ w_bf.T                                       # [A]
        logit = jnp.where(unseen_md[trigger[b]], 0.0, logit)          # zero unseen args
        rows.append(logit)
        labs.append(labels[b, s + 1])
    logits_all = jnp.stack(rows)
    labs = jnp.array(labs)
    lse = jax.nn.logsumexp(logits_all, axis=-1)
    picked = logits_all[jnp.arange(len(labs)), labs]
    return jnp.mean(lse - picked)


if __name__ == "__main__":
    key = jax.random.PRNGKey(0)
    B, S, H, A, VOCAB, NTRIG = 2, 16, 32, 10, 100, 4
    A_PAD = 128
    TILE_N = 128
    N_PAD = 256          # 2 grid steps -> exercises the pipelined row grid
    NTRIG_PAD = 8

    k1, k2, k3, k4, k5 = jax.random.split(key, 5)

    # TODO(synk): BertModel.from_pretrained has no in-script equivalent; the
    # encoder is replaced by a deterministic synthetic token-embedding lookup.
    emb_table = jax.random.normal(k1, (VOCAB, H), jnp.float32)
    input_ids = jax.random.randint(k2, (B, S), 0, VOCAB)
    labels = jax.random.randint(k3, (B, S), 0, A)
    # classifier: nn.Linear(2H, args_num, bias=False) -> weight [A, 2H]
    W = jax.random.normal(k4, (A, 2 * H), jnp.float32) * 0.1
    trigger = jnp.array([1, 3], dtype=jnp.int32)
    # unseen_metadata[trigger] -> boolean [A], True = unseen arg for trigger
    unseen_md = jax.random.uniform(k5, (NTRIG, A)) < 0.3

    # ner spans (start, end) per batch element, flattened:
    # batch 0 has 2 spans, batch 1 has 1 span.
    batch_idx = np.array([0, 0, 1], dtype=np.int32)
    starts = np.array([2, 5, 4], dtype=np.int32)
    ends = np.array([4, 9, 7], dtype=np.int32)
    N = len(batch_idx)

    # stand-in for self.bert(...)[0] : [B, S, H]
    seq = emb_table[input_ids]

    # ---- glue: gather spans & build compact kernel operands ---------------
    s_emb = seq[batch_idx, starts + 1]                  # [N, H]
    e_emb = seq[batch_idx, ends]                        # [N, H]
    x = jnp.concatenate([s_emb, e_emb], axis=-1)        # [N, 2H], == view(-1, 2H)
    # TODO(synk): Dropout(0.2) is identity in eval mode; stochastic training
    # dropout is omitted.
    x_pad = jnp.zeros((N_PAD, 2 * H), jnp.float32).at[:N].set(x)
    x_pad = x_pad.astype(jnp.bfloat16)                  # bf16 MXU input

    w_t = jnp.zeros((2 * H, A_PAD), jnp.float32).at[:, :A].set(W.T)
    w_t = w_t.astype(jnp.bfloat16)                      # bf16 MXU input

    # per-row int32 metadata (4 B/row each) instead of dense f32 masks
    row_labels = labels[batch_idx, starts + 1]          # label = labels[i][start+1]
    labels_col = jnp.zeros((N_PAD, 1), jnp.int32).at[:N, 0].set(row_labels)
    trig_col = jnp.zeros((N_PAD, 1), jnp.int32).at[:N, 0].set(trigger[batch_idx])

    # tiny resident unseen-arg table [NTRIG_PAD, A_PAD]
    unseen_tab = jnp.zeros((NTRIG_PAD, A_PAD), jnp.float32).at[:NTRIG, :A].set(
        unseen_md.astype(jnp.float32))

    n_valid = jnp.array([N], dtype=jnp.int32)           # scalar-prefetched

    loss = argument_detection_loss(n_valid, labels_col, trig_col, x_pad, w_t,
                                   unseen_tab, args_num=A, tile_n=TILE_N)
    loss = jax.block_until_ready(loss)

    ref = reference_loss(seq, batch_idx, starts, ends, labels, trigger,
                         unseen_md, W)
    ref = jax.block_until_ready(ref)

    assert np.allclose(np.array(loss)[0, 0], np.array(ref), rtol=1e-3,
                       atol=1e-3), (loss, ref)
    print("KERNEL_OK")
</pallas_src>

<mosaic_0001>
module attributes {stable_mosaic.version = 11 : i64} {
  func.func @_arg_loss_kernel(%arg0: i32, %arg1: memref<1xi32, #tpu.memory_space<smem>>, %arg2: memref<128x1xi32, #tpu.memory_space<vmem>>, %arg3: memref<128x1xi32, #tpu.memory_space<vmem>>, %arg4: memref<128x64xbf16, #tpu.memory_space<vmem>>, %arg5: memref<64x128xbf16, #tpu.memory_space<vmem>>, %arg6: memref<8x128xf32, #tpu.memory_space<vmem>>, %arg7: memref<1x1xf32, #tpu.memory_space<smem>>, %arg8: memref<1x1xf32, #tpu.memory_space<vmem>>, %arg9: memref<1x1xf32, #tpu.memory_space<vmem>>) attributes {dimension_semantics = [#tpu.dimension_semantics<arbitrary>], iteration_bounds = array<i64: 2>, scalar_prefetch = 1 : i64, scratch_operands = 2 : i64, tpu.core_type = #tpu.core_type<tc>, window_params = [{transform_indices = @transform_0, window_bounds = array<i64: 128, 1>}, {transform_indices = @transform_1, window_bounds = array<i64: 128, 1>}, {transform_indices = @transform_2, window_bounds = array<i64: 128, 64>}, {pipeline_mode = #tpu.pipeline_mode<synchronous>, transform_indices = @transform_3, window_bounds = array<i64: 64, 128>}, {pipeline_mode = #tpu.pipeline_mode<synchronous>, transform_indices = @transform_4, window_bounds = array<i64: 8, 128>}, {transform_indices = @transform_5, window_bounds = array<i64: 1, 1>}]} {
    %c0_i32 = arith.constant 0 : i32
    %0 = arith.cmpi eq, %arg0, %c0_i32 : i32
    %1 = arith.extui %0 : i1 to i32
    %c0_i32_0 = arith.constant 0 : i32
    %2 = arith.cmpi ne, %1, %c0_i32_0 : i32
    scf.if %2 {
      %cst_30 = arith.constant 0.000000e+00 : f32
      %69 = vector.broadcast %cst_30 : f32 to vector<1x1xf32>
      %c0_31 = arith.constant 0 : index
      %c0_32 = arith.constant 0 : index
      %70 = vector.load %arg8[%c0_31, %c0_32] : memref<1x1xf32, #tpu.memory_space<vmem>>, vector<1x1xf32>
      tpu.vector_store %arg8[%c0_31, %c0_32], %69 {strides = array<i32>} : memref<1x1xf32, #tpu.memory_space<vmem>>, vector<1x1xf32>,
      %cst_33 = arith.constant 0.000000e+00 : f32
      %71 = vector.broadcast %cst_33 : f32 to vector<1x1xf32>
      %c0_34 = arith.constant 0 : index
      %c0_35 = arith.constant 0 : index
      %72 = vector.load %arg9[%c0_34, %c0_35] : memref<1x1xf32, #tpu.memory_space<vmem>>, vector<1x1xf32>
      tpu.vector_store %arg9[%c0_34, %c0_35], %71 {strides = array<i32>} : memref<1x1xf32, #tpu.memory_space<vmem>>, vector<1x1xf32>,
    } else {
    }
    %c0 = arith.constant 0 : index
    %c0_1 = arith.constant 0 : index
    %3 = vector.load %arg4[%c0, %c0_1] : memref<128x64xbf16, #tpu.memory_space<vmem>>, vector<128x64xbf16>
    %c0_2 = arith.constant 0 : index
    %c0_3 = arith.constant 0 : index
    %4 = vector.load %arg5[%c0_2, %c0_3] : memref<64x128xbf16, #tpu.memory_space<vmem>>, vector<64x128xbf16>
    %cst = arith.constant dense<0.000000e+00> : vector<128x128xf32>
    %5 = tpu.matmul %3, %4, %cst {dimension_numbers = #tpu.dot_dimension_numbers<[1], [0], [0], [1], [0, 0, 1, 1], [], []>} : vector<128x64xbf16>, vector<64x128xbf16>, vector<128x128xf32> -> vector<128x128xf32>
    %6 = tpu.iota {dimensions = array<i32: 1>} : vector<128x128xi32>
    %c0_4 = arith.constant 0 : index
    %c0_5 = arith.constant 0 : index
    %7 = vector.load %arg3[%c0_4, %c0_5] : memref<128x1xi32, #tpu.memory_space<vmem>>, vector<128x1xi32>
    %8 = tpu.iota {dimensions = array<i32: 1>} : vector<128x8xi32>
    %9 = vector.broadcast %7 : vector<128x1xi32> to vector<128x8xi32>
    %10 = arith.cmpi eq, %8, %9 : vector<128x8xi32>
    %11 = arith.extui %10 : vector<128x8xi1> to vector<128x8xi32>
    %12 = arith.sitofp %11 : vector<128x8xi32> to vector<128x8xf32>
    %c0_6 = arith.constant 0 : index
    %c0_7 = arith.constant 0 : index
    %13 = vector.load %arg6[%c0_6, %c0_7] : memref<8x128xf32, #tpu.memory_space<vmem>>, vector<8x128xf32>
    %cst_8 = arith.constant dense<0.000000e+00> : vector<128x128xf32>
    %14 = tpu.matmul %12, %13, %cst_8 {dimension_numbers = #tpu.dot_dimension_numbers<[1], [0], [0], [1], [0, 0, 1, 1], [], []>} : vector<128x8xf32>, vector<8x128xf32>, vector<128x128xf32> -> vector<128x128xf32>
    %cst_9 = arith.constant 5.000000e-01 : f32
    %15 = vector.broadcast %cst_9 : f32 to vector<128x128xf32>
    %16 = arith.cmpf ogt, %14, %15 : vector<128x128xf32>
    %cst_10 = arith.constant 0.000000e+00 : f32
    %17 = vector.broadcast %cst_10 : f32 to vector<128x128xf32>
    %18 = arith.select %16, %17, %5 : vector<128x128xi1>, vector<128x128xf32>
    %c10_i32 = arith.constant 10 : i32
    %19 = vector.broadcast %c10_i32 : i32 to vector<128x128xi32>
    %20 = arith.cmpi sge, %6, %19 : vector<128x128xi32>
    %cst_11 = arith.constant -1.000000e+30 : f32
    %21 = vector.broadcast %cst_11 : f32 to vector<128x128xf32>
    %22 = arith.select %20, %21, %18 : vector<128x128xi1>, vector<128x128xf32>
    %23 = tpu.iota {dimensions = array<i32: 0>} : vector<128x1xi32>
    %c128_i32 = arith.constant 128 : i32
    %24 = arith.muli %arg0, %c128_i32 : i32
    %25 = vector.broadcast %24 : i32 to vector<128x1xi32>
    %26 = arith.addi %23, %25 : vector<128x1xi32>
    %c0_12 = arith.constant 0 : index
    %27 = memref.load %arg1[%c0_12] : memref<1xi32, #tpu.memory_space<smem>>
    %28 = vector.broadcast %27 : i32 to vector<128x1xi32>
    %29 = arith.cmpi slt, %26, %28 : vector<128x1xi32>
    %30 = arith.extui %29 : vector<128x1xi1> to vector<128x1xi32>
    %31 = arith.sitofp %30 : vector<128x1xi32> to vector<128x1xf32>
    %cst_13 = arith.constant dense<0xFF800000> : vector<128xf32>
    %32 = vector.multi_reduction <maximumf>, %22, %cst_13 [1] : vector<128x128xf32> to vector<128xf32>
    %33 = vector.shape_cast %32 : vector<128xf32> to vector<128x1xf32>
    %34 = vector.broadcast %33 : vector<128x1xf32> to vector<128x128xf32>
    %35 = arith.subf %22, %34 : vector<128x128xf32>
    %36 = math.exp %35 : vector<128x128xf32>
    %cst_14 = arith.constant dense<0.000000e+00> : vector<128xf32>
    %37 = vector.multi_reduction <add>, %36, %cst_14 [1] : vector<128x128xf32> to vector<128xf32>
    %38 = vector.shape_cast %37 : vector<128xf32> to vector<128x1xf32>
    %39 = math.log %38 : vector<128x1xf32>
    %40 = arith.addf %33, %39 : vector<128x1xf32>
    %c0_15 = arith.constant 0 : index
    %c0_16 = arith.constant 0 : index
    %41 = vector.load %arg2[%c0_15, %c0_16] : memref<128x1xi32, #tpu.memory_space<vmem>>, vector<128x1xi32>
    %42 = vector.broadcast %41 : vector<128x1xi32> to vector<128x128xi32>
    %43 = arith.cmpi eq, %6, %42 : vector<128x128xi32>
    %cst_17 = arith.constant 0.000000e+00 : f32
    %44 = vector.broadcast %cst_17 : f32 to vector<128x128xf32>
    %45 = arith.select %43, %22, %44 : vector<128x128xi1>, vector<128x128xf32>
    %cst_18 = arith.constant dense<0.000000e+00> : vector<128xf32>
    %46 = vector.multi_reduction <add>, %45, %cst_18 [1] : vector<128x128xf32> to vector<128xf32>
    %47 = vector.shape_cast %46 : vector<128xf32> to vector<128x1xf32>
    %48 = arith.subf %40, %47 : vector<128x1xf32>
    %49 = arith.mulf %48, %31 : vector<128x1xf32>
    %c0_19 = arith.constant 0 : index
    %c0_20 = arith.constant 0 : index
    %50 = vector.load %arg8[%c0_19, %c0_20] : memref<1x1xf32, #tpu.memory_space<vmem>>, vector<1x1xf32>
    %51 = vector.shape_cast %49 : vector<128x1xf32> to vector<1x128x1xf32>
    %cst_21 = arith.constant dense<0.000000e+00> : vector<1xf32>
    %52 = vector.multi_reduction <add>, %51, %cst_21 [1, 2] : vector<1x128x1xf32> to vector<1xf32>
    %53 = vector.shape_cast %52 : vector<1xf32> to vector<1x1x1xf32>
    %54 = vector.extract %53[0, 0, 0] : f32 from vector<1x1x1xf32>
    %55 = vector.broadcast %54 : f32 to vector<1x1xf32>
    %56 = arith.addf %50, %55 : vector<1x1xf32>
    %c0_22 = arith.constant 0 : index
    %c0_23 = arith.constant 0 : index
    %57 = vector.load %arg8[%c0_22, %c0_23] : memref<1x1xf32, #tpu.memory_space<vmem>>, vector<1x1xf32>
    tpu.vector_store %arg8[%c0_22, %c0_23], %56 {strides = array<i32>} : memref<1x1xf32, #tpu.memory_space<vmem>>, vector<1x1xf32>,
    %c0_24 = arith.constant 0 : index
    %c0_25 = arith.constant 0 : index
    %58 = vector.load %arg9[%c0_24, %c0_25] : memref<1x1xf32, #tpu.memory_space<vmem>>, vector<1x1xf32>
    %59 = vector.shape_cast %31 : vector<128x1xf32> to vector<1x128x1xf32>
    %cst_26 = arith.constant dense<0.000000e+00> : vector<1xf32>
    %60 = vector.multi_reduction <add>, %59, %cst_26 [1, 2] : vector<1x128x1xf32> to vector<1xf32>
    %61 = vector.shape_cast %60 : vector<1xf32> to vector<1x1x1xf32>
    %62 = vector.extract %61[0, 0, 0] : f32 from vector<1x1x1xf32>
    %63 = vector.broadcast %62 : f32 to vector<1x1xf32>
    %64 = arith.addf %58, %63 : vector<1x1xf32>
    %c0_27 = arith.constant 0 : index
    %c0_28 = arith.constant 0 : index
    %65 = vector.load %arg9[%c0_27, %c0_28] : memref<1x1xf32, #tpu.memory_space<vmem>>, vector<1x1xf32>
    tpu.vector_store %arg9[%c0_27, %c0_28], %64 {strides = array<i32>} : memref<1x1xf32, #tpu.memory_space<vmem>>, vector<1x1xf32>,
    %c1_i32 = arith.constant 1 : i32
    %66 = arith.cmpi eq, %arg0, %c1_i32 : i32
    %67 = arith.extui %66 : i1 to i32
    %c0_i32_29 = arith.constant 0 : i32
    %68 = arith.cmpi ne, %67, %c0_i32_29 : i32
    scf.if %68 {
      %c0_30 = arith.constant 0 : index
      %c0_31 = arith.constant 0 : index
      %69 = vector.load %arg8[%c0_30, %c0_31] : memref<1x1xf32, #tpu.memory_space<vmem>>, vector<1x1xf32>
      %c0_32 = arith.constant 0 : index
      %c0_33 = arith.constant 0 : index
      %70 = vector.load %arg9[%c0_32, %c0_33] : memref<1x1xf32, #tpu.memory_space<vmem>>, vector<1x1xf32>
      %cst_34 = arith.constant 1.000000e+00 : f32
      %71 = vector.broadcast %cst_34 : f32 to vector<1x1xf32>
      %72 = arith.maximumf %70, %71 : vector<1x1xf32>
      %73 = arith.divf %69, %72 : vector<1x1xf32>
      %74 = vector.extract %73[0, 0] : f32 from vector<1x1xf32>
      %c0_35 = arith.constant 0 : index
      %c0_36 = arith.constant 0 : index
      %75 = memref.load %arg7[%c0_35, %c0_36] : memref<1x1xf32, #tpu.memory_space<smem>>
      memref.store %74, %arg7[%c0_35, %c0_36] : memref<1x1xf32, #tpu.memory_space<smem>>
    } else {
    }
    return
  }
  func.func @transform_0(%arg0: i32, %arg1: memref<1xi32, #tpu.memory_space<smem>>) -> (i32, i32) {
    %c0_i32 = arith.constant 0 : i32
    %c0_i32_0 = arith.constant 0 : i32
    return %arg0, %c0_i32 : i32, i32
  }
  func.func @transform_1(%arg0: i32, %arg1: memref<1xi32, #tpu.memory_space<smem>>) -> (i32, i32) {
    %c0_i32 = arith.constant 0 : i32
    %c0_i32_0 = arith.constant 0 : i32
    return %arg0, %c0_i32 : i32, i32
  }
  func.func @transform_2(%arg0: i32, %arg1: memref<1xi32, #tpu.memory_space<smem>>) -> (i32, i32) {
    %c0_i32 = arith.constant 0 : i32
    %c0_i32_0 = arith.constant 0 : i32
    return %arg0, %c0_i32 : i32, i32
  }
  func.func @transform_3(%arg0: i32, %arg1: memref<1xi32, #tpu.memory_space<smem>>) -> (i32, i32) {
    %c0_i32 = arith.constant 0 : i32
    %c0_i32_0 = arith.constant 0 : i32
    %c0_i32_1 = arith.constant 0 : i32
    return %c0_i32, %c0_i32_0 : i32, i32
  }
  func.func @transform_4(%arg0: i32, %arg1: memref<1xi32, #tpu.memory_space<smem>>) -> (i32, i32) {
    %c0_i32 = arith.constant 0 : i32
    %c0_i32_0 = arith.constant 0 : i32
    %c0_i32_1 = arith.constant 0 : i32
    return %c0_i32, %c0_i32_0 : i32, i32
  }
  func.func @transform_5(%arg0: i32, %arg1: memref<1xi32, #tpu.memory_space<smem>>) -> (i32, i32) {
    %c0_i32 = arith.constant 0 : i32
    %c0_i32_0 = arith.constant 0 : i32
    %c0_i32_1 = arith.constant 0 : i32
    return %c0_i32, %c0_i32_0 : i32, i32
  }
}

</mosaic_0001>

<llo_original>
// kernel: tpu_custom_call.1
$region0: #{tpu_custom_call.1}
  #allocation0 [shape = 'u32[]', space=smem, size = 0x4, offset = 0x4, fixed_abs, tag = 'smem constant byte address 0x4 - core index']
  #allocation1 [shape = 'u32[144,128]{1,0:T(1,128)}', space=vmem, size = 0x12000, scoped, tag = 'internal scratch']
  #allocation2 [shape = 'f32[1,1]{1,0:T(1,128)}', space=vmem, size = 0x200, scoped, tag = 'scratch operand']
  #allocation3 [shape = 'f32[1,1]{1,0:T(1,128)}', space=vmem, size = 0x200, scoped, tag = 'scratch operand']
  #allocation4 [shape = 's32[1]{0}', space=sflag, size = 0x4, scoped, tag = 'scoped memory for tpu_custom_call.1']
  #allocation5 [shape = 's32[1]{0:T(128)S(6)}', space=smem, size = 0x200, scoped, tag = 'prefetched SMEM operand 0']
  %s0 = inlined_call_operand.<no memory space> [shape: s32[1], index: 0, kind: input, shape index: {}]
  %s1 = inlined_call_operand.vmem [shape: s32[256,1], index: 1, kind: input, shape index: {}]
  %s2 = inlined_call_operand.vmem [shape: s32[256,1], index: 2, kind: input, shape index: {}]
  %s3 = inlined_call_operand.vmem [shape: bf16[256,64], index: 3, kind: input, shape index: {}]
  %s4 = inlined_call_operand.vmem [shape: bf16[64,128], index: 4, kind: input, shape index: {}]
  %s5 = inlined_call_operand.vmem [shape: f32[8,128], index: 5, kind: input, shape index: {}]
  %s6 = inlined_call_operand.hbm [shape: f32[1,1], index: 6, kind: output, shape index: {}]
  %s7 = sld [smem:[#allocation0]]
  $region61: #{tpu_custom_call.1} parent=0
    _
  %s9 = ssub.s32 1, %s7
  %s10 = scalar_select 0, %s9, %s7
  %11 = sst [smem:[#allocation5]] %s0
  $region1: #{tpu_custom_call.1} parent=0
    #allocation6 [shape = 'u8[512]{0}', space=smem, size = 0x200, scoped, tag = 'output window, operand 0, single buffered']
    #allocation7 [shape = 's32[2]{0}', space=sflag, size = 0x8, scoped, tag = 'scoped memory for tpu_custom_call.1']
    %12 = vsyncpa [#allocation7], 0
    loop: start=0, step=1, limit=4
    $region2: #{tpu_custom_call.1} parent=1 // loop_pre_header
      _
    $region3: #{tpu_custom_call.1} parent=1 // loop_header
      %s14 = sphi 0, %s18
      %p15 = scmp.ge.s32.totalorder %s14, 4
      %s24 = sphi 0, %s26
      %s27 = sphi 0, %s24
      %s28 = sphi 0, %s27
      %s44 = sphi 0, %s28
      %s50 = sphi 0, %s52
      %s53 = sphi 0, %s50
      %s54 = sphi 0, %s53
      %s70 = sphi 0, %s54
      %s76 = sphi 0, %s78
      %s79 = sphi 0, %s76
      %s80 = sphi 0, %s79
      %s96 = sphi 0, %s80
      %s100 = sphi 0, %s100
      %s102 = sphi 0, %s100
      %s103 = sphi 0, %s102
      %s117 = sphi 0, %s103
      %s121 = sphi 0, %s121
      %s123 = sphi 0, %s121
      %s124 = sphi 0, %s123
      %s138 = sphi 0, %s124
      %s142 = sphi 0, %s142
      %s144 = sphi 0, %s142
      %s145 = sphi 0, %s144
      %s159 = sphi 0, %s145
    $region4: #{tpu_custom_call.1} parent=1 // loop_header_branch
      %17 = sbr.rel (%p15) target = $region8
    $region5: #{tpu_custom_call.1} parent=1 // loop_body
      %s19 = ssub.s32 %s14, 1
      %s20 = ssub.s32 %s14, 2
      %s21 = sadd.s32 %s14, 1
      %s22 = ssub.s32 %s14, %s21
      %p23 = scmp.eq.s32.totalorder %s22, 0
      %s25 = sadd.s32 %s24, 1
      %s26 = scalar_select %p23, %s24, %s25
      %p29 = pneg %p23
      %p30 = scmp.eq.s32.totalorder %s14, 1
      %p31 = por %p29, %p30
      %p32 = scmp.ne.s32.totalorder %s24, %s27
      %p33 = scmp.eq.s32.totalorder %s14, 0
      %p34 = por %p32, %p33
      %p35 = scmp.ne.s32.totalorder %s24, %s27
      %p36 = scmp.eq.s32.totalorder %s19, 1
      %p37 = por %p35, %p36
      %p38 = scmp.ne.s32.totalorder %s27, %s28
      %p39 = scmp.eq.s32.totalorder %s19, 0
      %p40 = por %p38, %p39
      %p41 = scmp.ne.s32.totalorder %s27, %s28
      %p42 = scmp.eq.s32.totalorder %s20, 1
      %p43 = por %p41, %p42
      %p45 = scmp.ne.s32.totalorder %s28, %s44
      %p46 = scmp.eq.s32.totalorder %s20, 0
      %p47 = por %p45, %p46
      %s48 = ssub.s32 %s14, %s21
      %p49 = scmp.eq.s32.totalorder %s48, 0
      %s51 = sadd.s32 %s50, 1
      %s52 = scalar_select %p49, %s50, %s51
      %p55 = pneg %p49
      %p56 = scmp.eq.s32.totalorder %s14, 1
      %p57 = por %p55, %p56
      %p58 = scmp.ne.s32.totalorder %s50, %s53
      %p59 = scmp.eq.s32.totalorder %s14, 0
      %p60 = por %p58, %p59
      %p61 = scmp.ne.s32.totalorder %s50, %s53
      %p62 = scmp.eq.s32.totalorder %s19, 1
      %p63 = por %p61, %p62
      %p64 = scmp.ne.s32.totalorder %s53, %s54
      %p65 = scmp.eq.s32.totalorder %s19, 0
      %p66 = por %p64, %p65
      %p67 = scmp.ne.s32.totalorder %s53, %s54
      %p68 = scmp.eq.s32.totalorder %s20, 1
      %p69 = por %p67, %p68
      %p71 = scmp.ne.s32.totalorder %s54, %s70
      %p72 = scmp.eq.s32.totalorder %s20, 0
      %p73 = por %p71, %p72
      %s74 = ssub.s32 %s14, %s21
      %p75 = scmp.eq.s32.totalorder %s74, 0
      %s77 = sadd.s32 %s76, 1
      %s78 = scalar_select %p75, %s76, %s77
      %p81 = pneg %p75
      %p82 = scmp.eq.s32.totalorder %s14, 1
      %p83 = por %p81, %p82
      %p84 = scmp.ne.s32.totalorder %s76, %s79
      %p85 = scmp.eq.s32.totalorder %s14, 0
      %p86 = por %p84, %p85
      %p87 = scmp.ne.s32.totalorder %s76, %s79
      %p88 = scmp.eq.s32.totalorder %s19, 1
      %p89 = por %p87, %p88
      %p90 = scmp.ne.s32.totalorder %s79, %s80
      %p91 = scmp.eq.s32.totalorder %s19, 0
      %p92 = por %p90, %p91
      %p93 = scmp.ne.s32.totalorder %s79, %s80
      %p94 = scmp.eq.s32.totalorder %s20, 1
      %p95 = por %p93, %p94
      %p97 = scmp.ne.s32.totalorder %s80, %s96
      %p98 = scmp.eq.s32.totalorder %s20, 0
      %p99 = por %p97, %p98
      %s101 = sadd.s32 %s100, 1
      %p104 = scmp.eq.s32.totalorder %s14, 1
      %p105 = scmp.ne.s32.totalorder %s100, %s102
      %p106 = scmp.eq.s32.totalorder %s14, 0
      %p107 = por %p105, %p106
      %p108 = scmp.ne.s32.totalorder %s100, %s102
      %p109 = scmp.eq.s32.totalorder %s19, 1
      %p110 = por %p108, %p109
      %p111 = scmp.ne.s32.totalorder %s102, %s103
      %p112 = scmp.eq.s32.totalorder %s19, 0
      %p113 = por %p111, %p112
      %p114 = scmp.ne.s32.totalorder %s102, %s103
      %p115 = scmp.eq.s32.totalorder %s20, 1
      %p116 = por %p114, %p115
      %p118 = scmp.ne.s32.totalorder %s103, %s117
      %p119 = scmp.eq.s32.totalorder %s20, 0
      %p120 = por %p118, %p119
      %s122 = sadd.s32 %s121, 1
      %p125 = scmp.eq.s32.totalorder %s14, 1
      %p126 = scmp.ne.s32.totalorder %s121, %s123
      %p127 = scmp.eq.s32.totalorder %s14, 0
      %p128 = por %p126, %p127
      %p129 = scmp.ne.s32.totalorder %s121, %s123
      %p130 = scmp.eq.s32.totalorder %s19, 1
      %p131 = por %p129, %p130
      %p132 = scmp.ne.s32.totalorder %s123, %s124
      %p133 = scmp.eq.s32.totalorder %s19, 0
      %p134 = por %p132, %p133
      %p135 = scmp.ne.s32.totalorder %s123, %s124
      %p136 = scmp.eq.s32.totalorder %s20, 1
      %p137 = por %p135, %p136
      %p139 = scmp.ne.s32.totalorder %s124, %s138
      %p140 = scmp.eq.s32.totalorder %s20, 0
      %p141 = por %p139, %p140
      %s143 = sadd.s32 %s142, 1
      %p146 = scmp.eq.s32.totalorder %s14, 1
      %p147 = scmp.ne.s32.totalorder %s142, %s144
      %p148 = scmp.eq.s32.totalorder %s14, 0
      %p149 = por %p147, %p148
      %p150 = scmp.ne.s32.totalorder %s142, %s144
      %p151 = scmp.eq.s32.totalorder %s19, 1
      %p152 = por %p150, %p151
      %p153 = scmp.ne.s32.totalorder %s144, %s145
      %p154 = scmp.eq.s32.totalorder %s19, 0
      %p155 = por %p153, %p154
      %p156 = scmp.ne.s32.totalorder %s144, %s145
      %p157 = scmp.eq.s32.totalorder %s20, 1
      %p158 = por %p156, %p157
      %p160 = scmp.ne.s32.totalorder %s145, %s159
      %p161 = scmp.eq.s32.totalorder %s20, 0
      %p162 = por %p160, %p161
      %p163 = scmp.le.s32.totalorder 1, %s14
      %p164 = scmp.lt.s32.totalorder %s14, 3
      %p165 = pnand %p163, %p164
      %p166 = pneg %p165
      // Predicated region
      $region9: #{tpu_custom_call.1} parent=5 // pred_check
        _
      $region10: #{tpu_custom_call.1} parent=5 // pred_check_branch
        %168 = sbr.rel (%p165) target = $region12
      $region11: #{tpu_custom_call.1} parent=5 // pred_region
        %s169 = ssub.s32 %s14, 1
        // Predicated region
        $region13: #{tpu_custom_call.1} parent=11 // pred_check
          %p170 = pneg %p113
        $region14: #{tpu_custom_call.1} parent=11 // pred_check_branch
          %172 = sbr.rel (%p170) target = $region16
        $region15: #{tpu_custom_call.1} parent=11 // pred_region
          _
        $region16: #{tpu_custom_call.1} parent=11 // pred_fallthru
          _
        // Predicated region
        $region17: #{tpu_custom_call.1} parent=11 // pred_check
          %p173 = pneg %p134
        $region18: #{tpu_custom_call.1} parent=11 // pred_check_branch
          %175 = sbr.rel (%p173) target = $region20
        $region19: #{tpu_custom_call.1} parent=11 // pred_region
          _
        $region20: #{tpu_custom_call.1} parent=11 // pred_fallthru
          _
      $region12: #{tpu_custom_call.1} parent=5 // pred_fallthru
        _
      %p176 = scmp.lt.s32.totalorder %s14, 2
      // Predicated region
      $region21: #{tpu_custom_call.1} parent=5 // pred_check
        %p177 = pneg %p176
      $region22: #{tpu_custom_call.1} parent=5 // pred_check_branch
        %179 = sbr.rel (%p177) target = $region24
      $region23: #{tpu_custom_call.1} parent=5 // pred_region
        // Predicated region
        $region25: #{tpu_custom_call.1} parent=23 // pred_check
          %p180 = pneg %p34
        $region26: #{tpu_custom_call.1} parent=23 // pred_check_branch
          %182 = sbr.rel (%p180) target = $region28
        $region27: #{tpu_custom_call.1} parent=23 // pred_region
          %s183 = smul.u32 16, %s14
          %p184 = scmp.lt.s32.totalorder %s183, 31
          %s185 = scalar_select %p184, %s183, 31
          %s186 = smul.addr %s185, 8
          %s187 = scalar_lea.vmem %s1, %s186
          %s188 = smul.u32 16, %s14
        $region28: #{tpu_custom_call.1} parent=23 // pred_fallthru
          _
        // Predicated region
        $region29: #{tpu_custom_call.1} parent=23 // pred_check
          %p189 = pneg %p60
        $region30: #{tpu_custom_call.1} parent=23 // pred_check_branch
          %191 = sbr.rel (%p189) target = $region32
        $region31: #{tpu_custom_call.1} parent=23 // pred_region
          %s192 = smul.u32 16, %s14
          %p193 = scmp.lt.s32.totalorder %s192, 31
          %s194 = scalar_select %p193, %s192, 31
          %s195 = smul.addr %s194, 8
          %s196 = scalar_lea.vmem %s2, %s195
          %s197 = smul.u32 16, %s14
        $region32: #{tpu_custom_call.1} parent=23 // pred_fallthru
          _
        // Predicated region
        $region33: #{tpu_custom_call.1} parent=23 // pred_check
          %p198 = pneg %p86
        $region34: #{tpu_custom_call.1} parent=23 // pred_check_branch
          %200 = sbr.rel (%p198) target = $region36
        $region35: #{tpu_custom_call.1} parent=23 // pred_region
          %s201 = smul.u32 16, %s14
          %p202 = scmp.lt.s32.totalorder %s201, 31
          %s203 = scalar_select %p202, %s201, 31
          %s204 = smul.addr %s203, 4
          %s205 = scalar_lea.vmem %s3, %s204
          %s206 = smul.u32 16, %s14
        $region36: #{tpu_custom_call.1} parent=23 // pred_fallthru
          _
      $region24: #{tpu_custom_call.1} parent=5 // pred_fallthru
        _
      %p207 = scmp.le.s32.totalorder 1, %s14
      %p208 = scmp.lt.s32.totalorder %s14, 3
      %p209 = pnand %p207, %p208
      %p210 = pneg %p209
      // Predicated region
      $region37: #{tpu_custom_call.1} parent=5 // pred_check
        _
      $region38: #{tpu_custom_call.1} parent=5 // pred_check_branch
        %212 = sbr.rel (%p209) target = $region40
      $region39: #{tpu_custom_call.1} parent=5 // pred_region
        %s213 = ssub.s32 %s14, 1
        %s214 = smul.u32 16, %s19
        %p215 = scmp.lt.s32.totalorder %s214, 31
        %s216 = scalar_select %p215, %s214, 31
        %s217 = smul.addr %s216, 8
        %s218 = scalar_lea.vmem %s1, %s217
        %p219 = pneg %p40
        %p220 = pneg %p37
        %s221 = smul.u32 16, %s19
        %p222 = scmp.lt.s32.totalorder %s221, 31
        %s223 = scalar_select %p222, %s221, 31
        %s224 = smul.addr %s223, 8
        %s225 = scalar_lea.vmem %s2, %s224
        %p226 = pneg %p66
        %p227 = pneg %p63
        %s228 = smul.u32 16, %s19
        %p229 = scmp.lt.s32.totalorder %s228, 31
        %s230 = scalar_select %p229, %s228, 31
        %s231 = smul.addr %s230, 4
        %s232 = scalar_lea.vmem %s3, %s231
        %p233 = pneg %p92
        %p234 = pneg %p89
        %p235 = pneg %p113
        %p236 = pneg %p110
        %p237 = pneg %p134
        %p238 = pneg %p131
        %p239 = pneg %p155
        %p240 = pneg %p152
        %s241 = smul.u32 16, %s19
        %p242 = scmp.lt.s32.totalorder %s241, 31
        %s243 = scalar_select %p242, %s241, 31
        %s244 = smul.addr %s243, 8
        %s245 = scalar_lea.vmem %s1, %s244
        %s246 = smul.u32 16, %s19
        %s247 = smul.u32 16, %s19
        %p248 = scmp.lt.s32.totalorder %s247, 31
        %s249 = scalar_select %p248, %s247, 31
        %s250 = smul.addr %s249, 8
        %s251 = scalar_lea.vmem %s2, %s250
        %s252 = smul.u32 16, %s19
        %s253 = smul.u32 16, %s19
        %p254 = scmp.lt.s32.totalorder %s253, 31
        %s255 = scalar_select %p254, %s253, 31
        %s256 = smul.addr %s255, 4
        %s257 = scalar_lea.vmem %s3, %s256
        %s258 = smul.u32 16, %s19
        %p260 = scmp.eq.s32.totalorder %s19, 0
        // Predicated region
        $region41: #{tpu_custom_call.1} parent=39 // pred_check
          %p261 = pneg %p260
        $region42: #{tpu_custom_call.1} parent=39 // pred_check_branch
          %263 = sbr.rel (%p261) target = $region44
        $region43: #{tpu_custom_call.1} parent=39 // pred_region
          %vm264 = vcmask 0
          %265 = vst.msk [vmem:[#allocation2] sm:$0x1] %vm264, 0.0
          %266 = vst.msk [vmem:[#allocation3] sm:$0x1] %vm264, 0.0
        $region44: #{tpu_custom_call.1} parent=39 // pred_fallthru
          _
        %v267 = vld [vmem:[%s257] sm:$0xf]
        %v268 = vld [vmem:[%s257 + $0x4] sm:$0xf]
        %v269 = vld [vmem:[%s257 + $0x8] sm:$0xf]
        %v270 = vld [vmem:[%s257 + $0xc] sm:$0xf]
        %v271 = vld [vmem:[%s257 + $0x10] sm:$0xf]
        %v272 = vld [vmem:[%s257 + $0x14] sm:$0xf]
        %v273 = vld [vmem:[%s257 + $0x18] sm:$0xf]
        %v274 = vld [vmem:[%s257 + $0x1c] sm:$0xf]
        %v275 = vld [vmem:[%s257 + $0x20] sm:$0xf]
        %v276 = vld [vmem:[%s257 + $0x24] sm:$0xf]
        %v277 = vld [vmem:[%s257 + $0x28] sm:$0xf]
        %v278 = vld [vmem:[%s257 + $0x2c] sm:$0xf]
        %v279 = vld [vmem:[%s257 + $0x30] sm:$0xf]
        %v280 = vld [vmem:[%s257 + $0x34] sm:$0xf]
        %v281 = vld [vmem:[%s257 + $0x38] sm:$0xf]
        %v282 = vld [vmem:[%s257 + $0x3c] sm:$0xf]
        %v283 = vld [vmem:[%s4] sm:$0xf]
        %v284 = vld [vmem:[%s4 + $0x4] sm:$0xf]
        %v285 = vld [vmem:[%s4 + $0x8] sm:$0xf]
        %v286 = vld [vmem:[%s4 + $0xc] sm:$0xf]
        %v287 = vld [vmem:[%s4 + $0x10] sm:$0xf]
        %v288 = vld [vmem:[%s4 + $0x14] sm:$0xf]
        %v289 = vld [vmem:[%s4 + $0x18] sm:$0xf]
        %v290 = vld [vmem:[%s4 + $0x1c] sm:$0xf]
        %v307 = vunpack.c.l.b16 %v267
        %v308 = vunpack.c.l.b16 %v268
        %v309 = vunpack.c.l.b16 %v269
        %v310 = vunpack.c.l.b16 %v270
        %v311 = vunpack.c.l.b16 %v271
        %v312 = vunpack.c.l.b16 %v272
        %v313 = vunpack.c.l.b16 %v273
        %v314 = vunpack.c.l.b16 %v274
        %v315 = vunpack.c.l.b16 %v275
        %v316 = vunpack.c.l.b16 %v276
        %v317 = vunpack.c.l.b16 %v277
        %v318 = vunpack.c.l.b16 %v278
        %v319 = vunpack.c.l.b16 %v279
        %v320 = vunpack.c.l.b16 %v280
        %v321 = vunpack.c.l.b16 %v281
        %v322 = vunpack.c.l.b16 %v282
        %v323 = vpack.c.b16 %v308, %v307
        %v324 = vpack.c.b16 %v310, %v309
        %v325 = vpack.c.b16 %v312, %v311
        %v326 = vpack.c.b16 %v314, %v313
        %v327 = vpack.c.b16 %v316, %v315
        %v328 = vpack.c.b16 %v318, %v317
        %v329 = vpack.c.b16 %v320, %v319
        %v330 = vpack.c.b16 %v322, %v321
        %v339 = vunpack.c.l.b16 %v283
        %v340 = vunpack.c.l.b16 %v284
        %v341 = vunpack.c.l.b16 %v285
        %v342 = vunpack.c.l.b16 %v286
        %v343 = vunpack.c.l.b16 %v287
        %v344 = vunpack.c.l.b16 %v288
        %v345 = vunpack.c.l.b16 %v289
        %v346 = vunpack.c.l.b16 %v290
        %v347 = vpack.c.b16 %v340, %v339
        %v348 = vpack.c.b16 %v342, %v341
        %v349 = vpack.c.b16 %v344, %v343
        %v350 = vpack.c.b16 %v346, %v345
        %vm355 = vcmask 523264
        %v357 = vsel %vm355, %v323, 0
        %v360 = vsel %vm355, %v324, 0
        %v363 = vsel %vm355, %v325, 0
        %v366 = vsel %vm355, %v326, 0
        %v369 = vsel %vm355, %v327, 0
        %v372 = vsel %vm355, %v328, 0
        %v375 = vsel %vm355, %v329, 0
        %v378 = vsel %vm355, %v330, 0
        %380 = vmatprep.subr.bf16.mxu0 0
        %381 = vmatpush1.bf16.msra.mxu0 0
        %382 = vmatprep.subr.bf16.mxu0 0
        %383 = vmatpush1.bf16.msra.mxu0 0
        %384 = vmatprep.subr.bf16.mxu0 0
        %385 = vmatpush1.bf16.msra.mxu0 0
        %386 = vmatprep.subr.bf16.mxu0 0
        %387 = vmatpush1.bf16.msra.mxu0 0
        %388 = vmatprep.subr.bf16.mxu0 0
        %389 = vmatpush1.bf16.msra.mxu0 %v350
        %390 = vmatprep.subr.bf16.mxu0 0
        %391 = vmatpush1.bf16.msra.mxu0 %v349
        %392 = vmatprep.subr.bf16.mxu0 0
        %393 = vmatpush1.bf16.msra.mxu0 %v348
        %394 = vmatprep.subr.bf16.mxu0 0
        %395 = vmatpush1.bf16.msra.mxu0 %v347
        %396 = vmatprep.subr.bf16.mxu0 0
        %397 = vmatpush2.bf16.msra.mxu0 0
        %398 = vmatprep.subr.bf16.mxu0 0
        %399 = vmatpush2.bf16.msra.mxu0 0
        %400 = vmatprep.subr.bf16.mxu0 0
        %401 = vmatpush2.bf16.msra.mxu0 0
        %402 = vmatprep.subr.bf16.mxu0 0
        %403 = vmatpush2.bf16.msra.mxu0 0
        %404 = vmatprep.subr.bf16.mxu0 0
        %405 = vmatpush2.bf16.msra.mxu0 0
        %406 = vmatprep.subr.bf16.mxu0 0
        %407 = vmatpush2.bf16.msra.mxu0 0
        %408 = vmatprep.subr.bf16.mxu0 0
        %409 = vmatpush2.bf16.msra.mxu0 0
        %410 = vmatprep.subr.bf16.mxu0 0
        %411 = vmatpush2.bf16.msra.mxu0 0
        %412 = vmatprep.mubr.bf16.mxu0 0
        %413 = vmatmul.mubr.bf16.gmra.mxu0 %v357
        %v414 = vpop.f32.mrf.mxu0
        %v415 = vadd.f32 0.0, %v414
        %v416 = vpop.f32.mrf.mxu0
        %v417 = vpop.f32.mrf.mxu0
        %v418 = vadd.f32 0.0, %v417
        %v419 = vpop.f32.mrf.mxu0
        %420 = vmatprep.mubr.bf16.mxu0 0
        %421 = vmatmul.mubr.bf16.gmra.mxu0 %v360
        %v422 = vpop.f32.mrf.mxu0
        %v423 = vadd.f32 0.0, %v422
        %v424 = vpop.f32.mrf.mxu0
        %v425 = vpop.f32.mrf.mxu0
        %v426 = vadd.f32 0.0, %v425
        %v427 = vpop.f32.mrf.mxu0
        %428 = vmatprep.mubr.bf16.mxu0 0
        %429 = vmatmul.mubr.bf16.gmra.mxu0 %v363
        %v430 = vpop.f32.mrf.mxu0
        %v431 = vadd.f32 0.0, %v430
        %v432 = vpop.f32.mrf.mxu0
        %v433 = vpop.f32.mrf.mxu0
        %v434 = vadd.f32 0.0, %v433
        %v435 = vpop.f32.mrf.mxu0
        %436 = vmatprep.mubr.bf16.mxu0 0
        %437 = vmatmul.mubr.bf16.gmra.mxu0 %v366
        %v438 = vpop.f32.mrf.mxu0
        %v439 = vadd.f32 0.0, %v438
        %v440 = vpop.f32.mrf.mxu0
        %v441 = vpop.f32.mrf.mxu0
        %v442 = vadd.f32 0.0, %v441
        %v443 = vpop.f32.mrf.mxu0
        %444 = vmatprep.mubr.bf16.mxu0 0
        %445 = vmatmul.mubr.bf16.gmra.mxu0 %v369
        %v446 = vpop.f32.mrf.mxu0
        %v447 = vadd.f32 0.0, %v446
        %v448 = vpop.f32.mrf.mxu0
        %v449 = vpop.f32.mrf.mxu0
        %v450 = vadd.f32 0.0, %v449
        %v451 = vpop.f32.mrf.mxu0
        %452 = vmatprep.mubr.bf16.mxu0 0
        %453 = vmatmul.mubr.bf16.gmra.mxu0 %v372
        %v454 = vpop.f32.mrf.mxu0
        %v455 = vadd.f32 0.0, %v454
        %v456 = vpop.f32.mrf.mxu0
        %v457 = vpop.f32.mrf.mxu0
        %v458 = vadd.f32 0.0, %v457
        %v459 = vpop.f32.mrf.mxu0
        %460 = vmatprep.mubr.bf16.mxu0 0
        %461 = vmatmul.mubr.bf16.gmra.mxu0 %v375
        %v462 = vpop.f32.mrf.mxu0
        %v463 = vadd.f32 0.0, %v462
        %v464 = vpop.f32.mrf.mxu0
        %v465 = vpop.f32.mrf.mxu0
        %v466 = vadd.f32 0.0, %v465
        %v467 = vpop.f32.mrf.mxu0
        %468 = vmatprep.mubr.bf16.mxu0 0
        %469 = vmatmul.mubr.bf16.gmra.mxu0 %v378
        %v470 = vpop.f32.mrf.mxu0
        %v471 = vadd.f32 0.0, %v470
        %v472 = vpop.f32.mrf.mxu0
        %v473 = vpop.f32.mrf.mxu0
        %v474 = vadd.f32 0.0, %v473
        %v475 = vpop.f32.mrf.mxu0
        %476 = vdwg.mxu0
        %v477 = vlaneseq
        %v478 = vand.u32 %v477, 127
        %v479 = vld [vmem:[%s251] sm:$0xff]
        %v480 = vld [vmem:[%s251 + $0x8] sm:$0xff]
        %v481 = vld [vmem:[%s251 + $0x10] sm:$0xff]
        %v482 = vld [vmem:[%s251 + $0x18] sm:$0xff]
        %v483 = vld [vmem:[%s251 + $0x20] sm:$0xff]
        %v484 = vld [vmem:[%s251 + $0x28] sm:$0xff]
        %v485 = vld [vmem:[%s251 + $0x30] sm:$0xff]
        %v486 = vld [vmem:[%s251 + $0x38] sm:$0xff]
        %v487 = vld [vmem:[%s251 + $0x40] sm:$0xff]
        %v488 = vld [vmem:[%s251 + $0x48] sm:$0xff]
        %v489 = vld [vmem:[%s251 + $0x50] sm:$0xff]
        %v490 = vld [vmem:[%s251 + $0x58] sm:$0xff]
        %v491 = vld [vmem:[%s251 + $0x60] sm:$0xff]
        %v492 = vld [vmem:[%s251 + $0x68] sm:$0xff]
        %v493 = vld [vmem:[%s251 + $0x70] sm:$0xff]
        %v494 = vld [vmem:[%s251 + $0x78] sm:$0xff]
        %495 = vset.pattern.permute.xlu0 0
        %496 = vperm.xlu0 %495, %v479
        %v497 = vpop.permute.xlu0 %496
        %498 = vset.pattern.permute.xlu0 0
        %499 = vperm.xlu0 %498, %v480
        %v500 = vpop.permute.xlu0 %499
        %501 = vset.pattern.permute.xlu0 0
        %502 = vperm.xlu0 %501, %v481
        %v503 = vpop.permute.xlu0 %502
        %504 = vset.pattern.permute.xlu0 0
        %505 = vperm.xlu0 %504, %v482
        %v506 = vpop.permute.xlu0 %505
        %507 = vset.pattern.permute.xlu0 0
        %508 = vperm.xlu0 %507, %v483
        %v509 = vpop.permute.xlu0 %508
        %510 = vset.pattern.permute.xlu0 0
        %511 = vperm.xlu0 %510, %v484
        %v512 = vpop.permute.xlu0 %511
        %513 = vset.pattern.permute.xlu0 0
        %514 = vperm.xlu0 %513, %v485
        %v515 = vpop.permute.xlu0 %514
        %516 = vset.pattern.permute.xlu0 0
        %517 = vperm.xlu0 %516, %v486
        %v518 = vpop.permute.xlu0 %517
        %519 = vset.pattern.permute.xlu0 0
        %520 = vperm.xlu0 %519, %v487
        %v521 = vpop.permute.xlu0 %520
        %522 = vset.pattern.permute.xlu0 0
        %523 = vperm.xlu0 %522, %v488
        %v524 = vpop.permute.xlu0 %523
        %525 = vset.pattern.permute.xlu0 0
        %526 = vperm.xlu0 %525, %v489
        %v527 = vpop.permute.xlu0 %526
        %528 = vset.pattern.permute.xlu0 0
        %529 = vperm.xlu0 %528, %v490
        %v530 = vpop.permute.xlu0 %529
        %531 = vset.pattern.permute.xlu0 0
        %532 = vperm.xlu0 %531, %v491
        %v533 = vpop.permute.xlu0 %532
        %534 = vset.pattern.permute.xlu0 0
        %535 = vperm.xlu0 %534, %v492
        %v536 = vpop.permute.xlu0 %535
        %537 = vset.pattern.permute.xlu0 0
        %538 = vperm.xlu0 %537, %v493
        %v539 = vpop.permute.xlu0 %538
        %540 = vset.pattern.permute.xlu0 0
        %541 = vperm.xlu0 %540, %v494
        %v542 = vpop.permute.xlu0 %541
        %vm543 = vcmp.eq.s32.totalorder %v478, %v497
        %vm544 = vcmp.eq.s32.totalorder %v478, %v500
        %vm545 = vcmp.eq.s32.totalorder %v478, %v503
        %vm546 = vcmp.eq.s32.totalorder %v478, %v506
        %vm547 = vcmp.eq.s32.totalorder %v478, %v509
        %vm548 = vcmp.eq.s32.totalorder %v478, %v512
        %vm549 = vcmp.eq.s32.totalorder %v478, %v515
        %vm550 = vcmp.eq.s32.totalorder %v478, %v518
        %vm551 = vcmp.eq.s32.totalorder %v478, %v521
        %vm552 = vcmp.eq.s32.totalorder %v478, %v524
        %vm553 = vcmp.eq.s32.totalorder %v478, %v527
        %vm554 = vcmp.eq.s32.totalorder %v478, %v530
        %vm555 = vcmp.eq.s32.totalorder %v478, %v533
        %vm556 = vcmp.eq.s32.totalorder %v478, %v536
        %vm557 = vcmp.eq.s32.totalorder %v478, %v539
        %vm558 = vcmp.eq.s32.totalorder %v478, %v542
        %v559 = vsel %vm543, 1, 0
        %v560 = vsel %vm544, 1, 0
        %v561 = vsel %vm545, 1, 0
        %v562 = vsel %vm546, 1, 0
        %v563 = vsel %vm547, 1, 0
        %v564 = vsel %vm548, 1, 0
        %v565 = vsel %vm549, 1, 0
        %v566 = vsel %vm550, 1, 0
        %v567 = vsel %vm551, 1, 0
        %v568 = vsel %vm552, 1, 0
        %v569 = vsel %vm553, 1, 0
        %v570 = vsel %vm554, 1, 0
        %v571 = vsel %vm555, 1, 0
        %v572 = vsel %vm556, 1, 0
        %v573 = vsel %vm557, 1, 0
        %v574 = vsel %vm558, 1, 0
        %v575 = vcvt.s32.f32 %v559
        %v576 = vcvt.s32.f32 %v560
        %v577 = vcvt.s32.f32 %v561
        %v578 = vcvt.s32.f32 %v562
        %v579 = vcvt.s32.f32 %v563
        %v580 = vcvt.s32.f32 %v564
        %v581 = vcvt.s32.f32 %v565
        %v582 = vcvt.s32.f32 %v566
        %v583 = vcvt.s32.f32 %v567
        %v584 = vcvt.s32.f32 %v568
        %v585 = vcvt.s32.f32 %v569
        %v586 = vcvt.s32.f32 %v570
        %v587 = vcvt.s32.f32 %v571
        %v588 = vcvt.s32.f32 %v572
        %v589 = vcvt.s32.f32 %v573
        %v590 = vcvt.s32.f32 %v574
        %v591 = vld [vmem:[%s5] sm:$0xff]
        %vm592 = vcmask 64512
        %v594 = vsel %vm592, %v575, 0
        %v597 = vsel %vm592, %v576, 0
        %v600 = vsel %vm592, %v577, 0
        %v603 = vsel %vm592, %v578, 0
        %v606 = vsel %vm592, %v579, 0
        %v609 = vsel %vm592, %v580, 0
        %v612 = vsel %vm592, %v581, 0
        %v615 = vsel %vm592, %v582, 0
        %v618 = vsel %vm592, %v583, 0
        %v621 = vsel %vm592, %v584, 0
        %v624 = vsel %vm592, %v585, 0
        %v627 = vsel %vm592, %v586, 0
        %v630 = vsel %vm592, %v587, 0
        %v633 = vsel %vm592, %v588, 0
        %v636 = vsel %vm592, %v589, 0
        %v639 = vsel %vm592, %v590, 0
        %641 = vmatprep.subr.mxu0 0.0
        %642 = vmatpush1.msra.mxu0 0.0
        %643 = vmatprep.subr.mxu0 0.0
        %644 = vmatpush1.msra.mxu0 0.0
        %645 = vmatprep.subr.mxu0 0.0
        %646 = vmatpush1.msra.mxu0 0.0
        %647 = vmatprep.subr.mxu0 0.0
        %648 = vmatpush1.msra.mxu0 0.0
        %649 = vmatprep.subr.mxu0 0.0
        %650 = vmatpush1.msra.mxu0 0.0
        %651 = vmatprep.subr.mxu0 0.0
        %652 = vmatpush1.msra.mxu0 0.0
        %653 = vmatprep.subr.mxu0 0.0
        %654 = vmatpush1.msra.mxu0 0.0
        %655 = vmatprep.subr.mxu0 0.0
        %656 = vmatpush1.msra.mxu0 0.0
        %657 = vmatprep.subr.mxu0 0.0
        %658 = vmatpush1.msra.mxu0 0.0
        %659 = vmatprep.subr.mxu0 0.0
        %660 = vmatpush1.msra.mxu0 0.0
        %661 = vmatprep.subr.mxu0 0.0
        %662 = vmatpush1.msra.mxu0 0.0
        %663 = vmatprep.subr.mxu0 0.0
        %664 = vmatpush1.msra.mxu0 0.0
        %665 = vmatprep.subr.mxu0 0.0
        %666 = vmatpush1.msra.mxu0 0.0
        %667 = vmatprep.subr.mxu0 0.0
        %668 = vmatpush1.msra.mxu0 0.0
        %669 = vmatprep.subr.mxu0 0.0
        %670 = vmatpush1.msra.mxu0 0.0
        %671 = vmatprep.subr.mxu0 0.0
        %672 = vmatpush1.msra.mxu0 %v591
        %673 = vmatprep.subr.mxu0 0.0
        %674 = vmatpush2.msra.mxu0 0.0
        %675 = vmatprep.subr.mxu0 0.0
        %676 = vmatpush2.msra.mxu0 0.0
        %677 = vmatprep.subr.mxu0 0.0
        %678 = vmatpush2.msra.mxu0 0.0
        %679 = vmatprep.subr.mxu0 0.0
        %680 = vmatpush2.msra.mxu0 0.0
        %681 = vmatprep.subr.mxu0 0.0
        %682 = vmatpush2.msra.mxu0 0.0
        %683 = vmatprep.subr.mxu0 0.0
        %684 = vmatpush2.msra.mxu0 0.0
        %685 = vmatprep.subr.mxu0 0.0
        %686 = vmatpush2.msra.mxu0 0.0
        %687 = vmatprep.subr.mxu0 0.0
        %688 = vmatpush2.msra.mxu0 0.0
        %689 = vmatprep.subr.mxu0 0.0
        %690 = vmatpush2.msra.mxu0 0.0
        %691 = vmatprep.subr.mxu0 0.0
        %692 = vmatpush2.msra.mxu0 0.0
        %693 = vmatprep.subr.mxu0 0.0
        %694 = vmatpush2.msra.mxu0 0.0
        %695 = vmatprep.subr.mxu0 0.0
        %696 = vmatpush2.msra.mxu0 0.0
        %697 = vmatprep.subr.mxu0 0.0
        %698 = vmatpush2.msra.mxu0 0.0
        %699 = vmatprep.subr.mxu0 0.0
        %700 = vmatpush2.msra.mxu0 0.0
        %701 = vmatprep.subr.mxu0 0.0
        %702 = vmatpush2.msra.mxu0 0.0
        %703 = vmatprep.subr.mxu0 0.0
        %704 = vmatpush2.msra.mxu0 0.0
        %705 = vmatprep.mubr.f32.mxu0 0.0
        %706 = vmatmul.mubr.f32.gmra.mxu0 %v594
        %v707 = vpop.f32.mrf.mxu0
        %v708 = vadd.f32 0.0, %v707
        %v709 = vpop.f32.mrf.mxu0
        %710 = vmatprep.mubr.f32.mxu0 0.0
        %711 = vmatmul.mubr.f32.gmra.mxu0 %v597
        %v712 = vpop.f32.mrf.mxu0
        %v713 = vadd.f32 0.0, %v712
        %v714 = vpop.f32.mrf.mxu0
        %715 = vmatprep.mubr.f32.mxu0 0.0
        %716 = vmatmul.mubr.f32.gmra.mxu0 %v600
        %v717 = vpop.f32.mrf.mxu0
        %v718 = vadd.f32 0.0, %v717
        %v719 = vpop.f32.mrf.mxu0
        %720 = vmatprep.mubr.f32.mxu0 0.0
        %721 = vmatmul.mubr.f32.gmra.mxu0 %v603
        %v722 = vpop.f32.mrf.mxu0
        %v723 = vadd.f32 0.0, %v722
        %v724 = vpop.f32.mrf.mxu0
        %725 = vmatprep.mubr.f32.mxu0 0.0
        %726 = vmatmul.mubr.f32.gmra.mxu0 %v606
        %v727 = vpop.f32.mrf.mxu0
        %v728 = vadd.f32 0.0, %v727
        %v729 = vpop.f32.mrf.mxu0
        %730 = vmatprep.mubr.f32.mxu0 0.0
        %731 = vmatmul.mubr.f32.gmra.mxu0 %v609
        %v732 = vpop.f32.mrf.mxu0
        %v733 = vadd.f32 0.0, %v732
        %v734 = vpop.f32.mrf.mxu0
        %735 = vmatprep.mubr.f32.mxu0 0.0
        %736 = vmatmul.mubr.f32.gmra.mxu0 %v612
        %v737 = vpop.f32.mrf.mxu0
        %v738 = vadd.f32 0.0, %v737
        %v739 = vpop.f32.mrf.mxu0
        %740 = vmatprep.mubr.f32.mxu0 0.0
        %741 = vmatmul.mubr.f32.gmra.mxu0 %v615
        %v742 = vpop.f32.mrf.mxu0
        %v743 = vadd.f32 0.0, %v742
        %v744 = vpop.f32.mrf.mxu0
        %745 = vmatprep.mubr.f32.mxu0 0.0
        %746 = vmatmul.mubr.f32.gmra.mxu0 %v618
        %v747 = vpop.f32.mrf.mxu0
        %v748 = vadd.f32 0.0, %v747
        %v749 = vpop.f32.mrf.mxu0
        %750 = vmatprep.mubr.f32.mxu0 0.0
        %751 = vmatmul.mubr.f32.gmra.mxu0 %v621
        %v752 = vpop.f32.mrf.mxu0
        %v753 = vadd.f32 0.0, %v752
        %v754 = vpop.f32.mrf.mxu0
        %755 = vmatprep.mubr.f32.mxu0 0.0
        %756 = vmatmul.mubr.f32.gmra.mxu0 %v624
        %v757 = vpop.f32.mrf.mxu0
        %v758 = vadd.f32 0.0, %v757
        %v759 = vpop.f32.mrf.mxu0
        %760 = vmatprep.mubr.f32.mxu0 0.0
        %761 = vmatmul.mubr.f32.gmra.mxu0 %v627
        %v762 = vpop.f32.mrf.mxu0
        %v763 = vadd.f32 0.0, %v762
        %v764 = vpop.f32.mrf.mxu0
        %765 = vmatprep.mubr.f32.mxu0 0.0
        %766 = vmatmul.mubr.f32.gmra.mxu0 %v630
        %v767 = vpop.f32.mrf.mxu0
        %v768 = vadd.f32 0.0, %v767
        %v769 = vpop.f32.mrf.mxu0
        %770 = vmatprep.mubr.f32.mxu0 0.0
        %771 = vmatmul.mubr.f32.gmra.mxu0 %v633
        %v772 = vpop.f32.mrf.mxu0
        %v773 = vadd.f32 0.0, %v772
        %v774 = vpop.f32.mrf.mxu0
        %775 = vmatprep.mubr.f32.mxu0 0.0
        %776 = vmatmul.mubr.f32.gmra.mxu0 %v636
        %v777 = vpop.f32.mrf.mxu0
        %v778 = vadd.f32 0.0, %v777
        %v779 = vpop.f32.mrf.mxu0
        %780 = vmatprep.mubr.f32.mxu0 0.0
        %781 = vmatmul.mubr.f32.gmra.mxu0 %v639
        %v782 = vpop.f32.mrf.mxu0
        %v783 = vadd.f32 0.0, %v782
        %v784 = vpop.f32.mrf.mxu0
        %785 = vdwg.mxu0
        %vm786 = vcmp.gt.f32.partialorder %v708, 0.5
        %vm787 = vcmp.gt.f32.partialorder %v713, 0.5
        %vm788 = vcmp.gt.f32.partialorder %v718, 0.5
        %vm789 = vcmp.gt.f32.partialorder %v723, 0.5
        %vm790 = vcmp.gt.f32.partialorder %v728, 0.5
        %vm791 = vcmp.gt.f32.partialorder %v733, 0.5
        %vm792 = vcmp.gt.f32.partialorder %v738, 0.5
        %vm793 = vcmp.gt.f32.partialorder %v743, 0.5
        %vm794 = vcmp.gt.f32.partialorder %v748, 0.5
        %vm795 = vcmp.gt.f32.partialorder %v753, 0.5
        %vm796 = vcmp.gt.f32.partialorder %v758, 0.5
        %vm797 = vcmp.gt.f32.partialorder %v763, 0.5
        %vm798 = vcmp.gt.f32.partialorder %v768, 0.5
        %vm799 = vcmp.gt.f32.partialorder %v773, 0.5
        %vm800 = vcmp.gt.f32.partialorder %v778, 0.5
        %vm801 = vcmp.gt.f32.partialorder %v783, 0.5
        %v802 = vsel %vm786, 0.0, %v415
        %v803 = vsel %vm787, 0.0, %v418
        %v804 = vsel %vm788, 0.0, %v423
        %v805 = vsel %vm789, 0.0, %v426
        %v806 = vsel %vm790, 0.0, %v431
        %v807 = vsel %vm791, 0.0, %v434
        %v808 = vsel %vm792, 0.0, %v439
        %v809 = vsel %vm793, 0.0, %v442
        %v810 = vsel %vm794, 0.0, %v447
        %v811 = vsel %vm795, 0.0, %v450
        %v812 = vsel %vm796, 0.0, %v455
        %v813 = vsel %vm797, 0.0, %v458
        %v814 = vsel %vm798, 0.0, %v463
        %v815 = vsel %vm799, 0.0, %v466
        %v816 = vsel %vm800, 0.0, %v471
        %v817 = vsel %vm801, 0.0, %v474
        %vm818 = vcmp.ge.s32.totalorder %v478, 10
        %v819 = vsel %vm818, -1e+30, %v802
        %v820 = vsel %vm818, -1e+30, %v803
        %v821 = vsel %vm818, -1e+30, %v804
        %v822 = vsel %vm818, -1e+30, %v805
        %v823 = vsel %vm818, -1e+30, %v806
        %v824 = vsel %vm818, -1e+30, %v807
        %v825 = vsel %vm818, -1e+30, %v808
        %v826 = vsel %vm818, -1e+30, %v809
        %v827 = vsel %vm818, -1e+30, %v810
        %v828 = vsel %vm818, -1e+30, %v811
        %v829 = vsel %vm818, -1e+30, %v812
        %v830 = vsel %vm818, -1e+30, %v813
        %v831 = vsel %vm818, -1e+30, %v814
        %v832 = vsel %vm818, -1e+30, %v815
        %v833 = vsel %vm818, -1e+30, %v816
        %v834 = vsel %vm818, -1e+30, %v817
        %v835 = vlaneseq
        %v836 = vshrl.u32 %v835, 7
        %v837 = vadd.s32 %v836, 8
        %v838 = vadd.s32 %v836, 16
        %v839 = vadd.s32 %v836, 24
        %v840 = vadd.s32 %v836, 32
        %v841 = vadd.s32 %v836, 40
        %v842 = vadd.s32 %v836, 48
        %v843 = vadd.s32 %v836, 56
        %v844 = vadd.s32 %v836, 64
        %v845 = vadd.s32 %v836, 72
        %v846 = vadd.s32 %v836, 80
        %v847 = vadd.s32 %v836, 88
        %v848 = vadd.s32 %v836, 96
        %v849 = vadd.s32 %v836, 104
        %v850 = vadd.s32 %v836, 112
        %v851 = vadd.s32 %v836, 120
        %s852 = smul.u32 %s19, 128
        %v853 = vstv %s852
        %v854 = vadd.s32 %v836, %v853
        %v855 = vadd.s32 %v837, %v853
        %v856 = vadd.s32 %v838, %v853
        %v857 = vadd.s32 %v839, %v853
        %v858 = vadd.s32 %v840, %v853
        %v859 = vadd.s32 %v841, %v853
        %v860 = vadd.s32 %v842, %v853
        %v861 = vadd.s32 %v843, %v853
        %v862 = vadd.s32 %v844, %v853
        %v863 = vadd.s32 %v845, %v853
        %v864 = vadd.s32 %v846, %v853
        %v865 = vadd.s32 %v847, %v853
        %v866 = vadd.s32 %v848, %v853
        %v867 = vadd.s32 %v849, %v853
        %v868 = vadd.s32 %v850, %v853
        %v869 = vadd.s32 %v851, %v853
        %s870 = sld [smem:[#allocation5]]
        %v871 = vstv %s870
        %vm872 = vcmp.lt.s32.totalorder %v854, %v871
        %vm873 = vcmp.lt.s32.totalorder %v855, %v871
        %vm874 = vcmp.lt.s32.totalorder %v856, %v871
        %vm875 = vcmp.lt.s32.totalorder %v857, %v871
        %vm876 = vcmp.lt.s32.totalorder %v858, %v871
        %vm877 = vcmp.lt.s32.totalorder %v859, %v871
        %vm878 = vcmp.lt.s32.totalorder %v860, %v871
        %vm879 = vcmp.lt.s32.totalorder %v861, %v871
        %vm880 = vcmp.lt.s32.totalorder %v862, %v871
        %vm881 = vcmp.lt.s32.totalorder %v863, %v871
        %vm882 = vcmp.lt.s32.totalorder %v864, %v871
        %vm883 = vcmp.lt.s32.totalorder %v865, %v871
        %vm884 = vcmp.lt.s32.totalorder %v866, %v871
        %vm885 = vcmp.lt.s32.totalorder %v867, %v871
        %vm886 = vcmp.lt.s32.totalorder %v868, %v871
        %vm887 = vcmp.lt.s32.totalorder %v869, %v871
        %v888 = vsel %vm872, 1, 0
        %v889 = vsel %vm873, 1, 0
        %v890 = vsel %vm874, 1, 0
        %v891 = vsel %vm875, 1, 0
        %v892 = vsel %vm876, 1, 0
        %v893 = vsel %vm877, 1, 0
        %v894 = vsel %vm878, 1, 0
        %v895 = vsel %vm879, 1, 0
        %v896 = vsel %vm880, 1, 0
        %v897 = vsel %vm881, 1, 0
        %v898 = vsel %vm882, 1, 0
        %v899 = vsel %vm883, 1, 0
        %v900 = vsel %vm884, 1, 0
        %v901 = vsel %vm885, 1, 0
        %v902 = vsel %vm886, 1, 0
        %v903 = vsel %vm887, 1, 0
        %v904 = vcvt.s32.f32 %v888
        %v905 = vcvt.s32.f32 %v889
        %v906 = vcvt.s32.f32 %v890
        %v907 = vcvt.s32.f32 %v891
        %v908 = vcvt.s32.f32 %v892
        %v909 = vcvt.s32.f32 %v893
        %v910 = vcvt.s32.f32 %v894
        %v911 = vcvt.s32.f32 %v895
        %v912 = vcvt.s32.f32 %v896
        %v913 = vcvt.s32.f32 %v897
        %v914 = vcvt.s32.f32 %v898
        %v915 = vcvt.s32.f32 %v899
        %v916 = vcvt.s32.f32 %v900
        %v917 = vcvt.s32.f32 %v901
        %v918 = vcvt.s32.f32 %v902
        %v919 = vcvt.s32.f32 %v903
        %920 = vmax.xlane.f32.xlu0 %v819
        %v921 = vpop.xlane.xlu0 %920
        %922 = vmax.xlane.f32.xlu0 %v820
        %v923 = vpop.xlane.xlu0 %922
        %924 = vmax.xlane.f32.xlu0 %v821
        %v925 = vpop.xlane.xlu0 %924
        %926 = vmax.xlane.f32.xlu0 %v822
        %v927 = vpop.xlane.xlu0 %926
        %928 = vmax.xlane.f32.xlu0 %v823
        %v929 = vpop.xlane.xlu0 %928
        %930 = vmax.xlane.f32.xlu0 %v824
        %v931 = vpop.xlane.xlu0 %930
        %932 = vmax.xlane.f32.xlu0 %v825
        %v933 = vpop.xlane.xlu0 %932
        %934 = vmax.xlane.f32.xlu0 %v826
        %v935 = vpop.xlane.xlu0 %934
        %936 = vmax.xlane.f32.xlu0 %v827
        %v937 = vpop.xlane.xlu0 %936
        %938 = vmax.xlane.f32.xlu0 %v828
        %v939 = vpop.xlane.xlu0 %938
        %940 = vmax.xlane.f32.xlu0 %v829
        %v941 = vpop.xlane.xlu0 %940
        %942 = vmax.xlane.f32.xlu0 %v830
        %v943 = vpop.xlane.xlu0 %942
        %944 = vmax.xlane.f32.xlu0 %v831
        %v945 = vpop.xlane.xlu0 %944
        %946 = vmax.xlane.f32.xlu0 %v832
        %v947 = vpop.xlane.xlu0 %946
        %948 = vmax.xlane.f32.xlu0 %v833
        %v949 = vpop.xlane.xlu0 %948
        %950 = vmax.xlane.f32.xlu0 %v834
        %v951 = vpop.xlane.xlu0 %950
        %v952 = vsub.f32 %v819, %v921
        %v953 = vsub.f32 %v820, %v923
        %v954 = vsub.f32 %v821, %v925
        %v955 = vsub.f32 %v822, %v927
        %v956 = vsub.f32 %v823, %v929
        %v957 = vsub.f32 %v824, %v931
        %v958 = vsub.f32 %v825, %v933
        %v959 = vsub.f32 %v826, %v935
        %v960 = vsub.f32 %v827, %v937
        %v961 = vsub.f32 %v828, %v939
        %v962 = vsub.f32 %v829, %v941
        %v963 = vsub.f32 %v830, %v943
        %v964 = vsub.f32 %v831, %v945
        %v965 = vsub.f32 %v832, %v947
        %v966 = vsub.f32 %v833, %v949
        %v967 = vsub.f32 %v834, %v951
        %v968 = vmul.f32 %v952, 1.442695
        %v969 = vpow.pop %v968
        %v970 = vmul.f32 %v953, 1.442695
        %v971 = vpow.pop %v970
        %v972 = vmul.f32 %v954, 1.442695
        %v973 = vpow.pop %v972
        %v974 = vmul.f32 %v955, 1.442695
        %v975 = vpow.pop %v974
        %v976 = vmul.f32 %v956, 1.442695
        %v977 = vpow.pop %v976
        %v978 = vmul.f32 %v957, 1.442695
        %v979 = vpow.pop %v978
        %v980 = vmul.f32 %v958, 1.442695
        %v981 = vpow.pop %v980
        %v982 = vmul.f32 %v959, 1.442695
        %v983 = vpow.pop %v982
        %v984 = vmul.f32 %v960, 1.442695
        %v985 = vpow.pop %v984
        %v986 = vmul.f32 %v961, 1.442695
        %v987 = vpow.pop %v986
        %v988 = vmul.f32 %v962, 1.442695
        %v989 = vpow.pop %v988
        %v990 = vmul.f32 %v963, 1.442695
        %v991 = vpow.pop %v990
        %v992 = vmul.f32 %v964, 1.442695
        %v993 = vpow.pop %v992
        %v994 = vmul.f32 %v965, 1.442695
        %v995 = vpow.pop %v994
        %v996 = vmul.f32 %v966, 1.442695
        %v997 = vpow.pop %v996
        %v998 = vmul.f32 %v967, 1.442695
        %v999 = vpow.pop %v998
        %1000 = vadd.xlane.f32.xlu0 %v969
        %v1001 = vpop.xlane.xlu0 %1000
        %1002 = vadd.xlane.f32.xlu0 %v971
        %v1003 = vpop.xlane.xlu0 %1002
        %1004 = vadd.xlane.f32.xlu0 %v973
        %v1005 = vpop.xlane.xlu0 %1004
        %1006 = vadd.xlane.f32.xlu0 %v975
        %v1007 = vpop.xlane.xlu0 %1006
        %1008 = vadd.xlane.f32.xlu0 %v977
        %v1009 = vpop.xlane.xlu0 %1008
        %1010 = vadd.xlane.f32.xlu0 %v979
        %v1011 = vpop.xlane.xlu0 %1010
        %1012 = vadd.xlane.f32.xlu0 %v981
        %v1013 = vpop.xlane.xlu0 %1012
        %1014 = vadd.xlane.f32.xlu0 %v983
        %v1015 = vpop.xlane.xlu0 %1014
        %1016 = vadd.xlane.f32.xlu0 %v985
        %v1017 = vpop.xlane.xlu0 %1016
        %1018 = vadd.xlane.f32.xlu0 %v987
        %v1019 = vpop.xlane.xlu0 %1018
        %1020 = vadd.xlane.f32.xlu0 %v989
        %v1021 = vpop.xlane.xlu0 %1020
        %1022 = vadd.xlane.f32.xlu0 %v991
        %v1023 = vpop.xlane.xlu0 %1022
        %1024 = vadd.xlane.f32.xlu0 %v993
        %v1025 = vpop.xlane.xlu0 %1024
        %1026 = vadd.xlane.f32.xlu0 %v995
        %v1027 = vpop.xlane.xlu0 %1026
        %1028 = vadd.xlane.f32.xlu0 %v997
        %v1029 = vpop.xlane.xlu0 %1028
        %1030 = vadd.xlane.f32.xlu0 %v999
        %v1031 = vpop.xlane.xlu0 %1030
        %v1032 = vlog2.pop %v1001
        %v1033 = vmul.f32 %v1032, 0.6931472
        %v1034 = vlog2.pop %v1003
        %v1035 = vmul.f32 %v1034, 0.6931472
        %v1036 = vlog2.pop %v1005
        %v1037 = vmul.f32 %v1036, 0.6931472
        %v1038 = vlog2.pop %v1007
        %v1039 = vmul.f32 %v1038, 0.6931472
        %v1040 = vlog2.pop %v1009
        %v1041 = vmul.f32 %v1040, 0.6931472
        %v1042 = vlog2.pop %v1011
        %v1043 = vmul.f32 %v1042, 0.6931472
        %v1044 = vlog2.pop %v1013
        %v1045 = vmul.f32 %v1044, 0.6931472
        %v1046 = vlog2.pop %v1015
        %v1047 = vmul.f32 %v1046, 0.6931472
        %v1048 = vlog2.pop %v1017
        %v1049 = vmul.f32 %v1048, 0.6931472
        %v1050 = vlog2.pop %v1019
        %v1051 = vmul.f32 %v1050, 0.6931472
        %v1052 = vlog2.pop %v1021
        %v1053 = vmul.f32 %v1052, 0.6931472
        %v1054 = vlog2.pop %v1023
        %v1055 = vmul.f32 %v1054, 0.6931472
        %v1056 = vlog2.pop %v1025
        %v1057 = vmul.f32 %v1056, 0.6931472
        %v1058 = vlog2.pop %v1027
        %v1059 = vmul.f32 %v1058, 0.6931472
        %v1060 = vlog2.pop %v1029
        %v1061 = vmul.f32 %v1060, 0.6931472
        %v1062 = vlog2.pop %v1031
        %v1063 = vmul.f32 %v1062, 0.6931472
        %v1064 = vadd.f32 %v921, %v1033
        %v1065 = vadd.f32 %v923, %v1035
        %v1066 = vadd.f32 %v925, %v1037
        %v1067 = vadd.f32 %v927, %v1039
        %v1068 = vadd.f32 %v929, %v1041
        %v1069 = vadd.f32 %v931, %v1043
        %v1070 = vadd.f32 %v933, %v1045
        %v1071 = vadd.f32 %v935, %v1047
        %v1072 = vadd.f32 %v937, %v1049
        %v1073 = vadd.f32 %v939, %v1051
        %v1074 = vadd.f32 %v941, %v1053
        %v1075 = vadd.f32 %v943, %v1055
        %v1076 = vadd.f32 %v945, %v1057
        %v1077 = vadd.f32 %v947, %v1059
        %v1078 = vadd.f32 %v949, %v1061
        %v1079 = vadd.f32 %v951, %v1063
        %v1080 = vld [vmem:[%s245] sm:$0xff]
        %v1081 = vld [vmem:[%s245 + $0x8] sm:$0xff]
        %v1082 = vld [vmem:[%s245 + $0x10] sm:$0xff]
        %v1083 = vld [vmem:[%s245 + $0x18] sm:$0xff]
        %v1084 = vld [vmem:[%s245 + $0x20] sm:$0xff]
        %v1085 = vld [vmem:[%s245 + $0x28] sm:$0xff]
        %v1086 = vld [vmem:[%s245 + $0x30] sm:$0xff]
        %v1087 = vld [vmem:[%s245 + $0x38] sm:$0xff]
        %v1088 = vld [vmem:[%s245 + $0x40] sm:$0xff]
        %v1089 = vld [vmem:[%s245 + $0x48] sm:$0xff]
        %v1090 = vld [vmem:[%s245 + $0x50] sm:$0xff]
        %v1091 = vld [vmem:[%s245 + $0x58] sm:$0xff]
        %v1092 = vld [vmem:[%s245 + $0x60] sm:$0xff]
        %v1093 = vld [vmem:[%s245 + $0x68] sm:$0xff]
        %v1094 = vld [vmem:[%s245 + $0x70] sm:$0xff]
        %v1095 = vld [vmem:[%s245 + $0x78] sm:$0xff]
        %1096 = vset.pattern.permute.xlu0 0
        %1097 = vperm.xlu0 %1096, %v1080
        %v1098 = vpop.permute.xlu0 %1097
        %1099 = vset.pattern.permute.xlu0 0
        %1100 = vperm.xlu0 %1099, %v1081
        %v1101 = vpop.permute.xlu0 %1100
        %1102 = vset.pattern.permute.xlu0 0
        %1103 = vperm.xlu0 %1102, %v1082
        %v1104 = vpop.permute.xlu0 %1103
        %1105 = vset.pattern.permute.xlu0 0
        %1106 = vperm.xlu0 %1105, %v1083
        %v1107 = vpop.permute.xlu0 %1106
        %1108 = vset.pattern.permute.xlu0 0
        %1109 = vperm.xlu0 %1108, %v1084
        %v1110 = vpop.permute.xlu0 %1109
        %1111 = vset.pattern.permute.xlu0 0
        %1112 = vperm.xlu0 %1111, %v1085
        %v1113 = vpop.permute.xlu0 %1112
        %1114 = vset.pattern.permute.xlu0 0
        %1115 = vperm.xlu0 %1114, %v1086
        %v1116 = vpop.permute.xlu0 %1115
        %1117 = vset.pattern.permute.xlu0 0
        %1118 = vperm.xlu0 %1117, %v1087
        %v1119 = vpop.permute.xlu0 %1118
        %1120 = vset.pattern.permute.xlu0 0
        %1121 = vperm.xlu0 %1120, %v1088
        %v1122 = vpop.permute.xlu0 %1121
        %1123 = vset.pattern.permute.xlu0 0
        %1124 = vperm.xlu0 %1123, %v1089
        %v1125 = vpop.permute.xlu0 %1124
        %1126 = vset.pattern.permute.xlu0 0
        %1127 = vperm.xlu0 %1126, %v1090
        %v1128 = vpop.permute.xlu0 %1127
        %1129 = vset.pattern.permute.xlu0 0
        %1130 = vperm.xlu0 %1129, %v1091
        %v1131 = vpop.permute.xlu0 %1130
        %1132 = vset.pattern.permute.xlu0 0
        %1133 = vperm.xlu0 %1132, %v1092
        %v1134 = vpop.permute.xlu0 %1133
        %1135 = vset.pattern.permute.xlu0 0
        %1136 = vperm.xlu0 %1135, %v1093
        %v1137 = vpop.permute.xlu0 %1136
        %1138 = vset.pattern.permute.xlu0 0
        %1139 = vperm.xlu0 %1138, %v1094
        %v1140 = vpop.permute.xlu0 %1139
        %1141 = vset.pattern.permute.xlu0 0
        %1142 = vperm.xlu0 %1141, %v1095
        %v1143 = vpop.permute.xlu0 %1142
        %vm1144 = vcmp.eq.s32.totalorder %v478, %v1098
        %vm1145 = vcmp.eq.s32.totalorder %v478, %v1101
        %vm1146 = vcmp.eq.s32.totalorder %v478, %v1104
        %vm1147 = vcmp.eq.s32.totalorder %v478, %v1107
        %vm1148 = vcmp.eq.s32.totalorder %v478, %v1110
        %vm1149 = vcmp.eq.s32.totalorder %v478, %v1113
        %vm1150 = vcmp.eq.s32.totalorder %v478, %v1116
        %vm1151 = vcmp.eq.s32.totalorder %v478, %v1119
        %vm1152 = vcmp.eq.s32.totalorder %v478, %v1122
        %vm1153 = vcmp.eq.s32.totalorder %v478, %v1125
        %vm1154 = vcmp.eq.s32.totalorder %v478, %v1128
        %vm1155 = vcmp.eq.s32.totalorder %v478, %v1131
        %vm1156 = vcmp.eq.s32.totalorder %v478, %v1134
        %vm1157 = vcmp.eq.s32.totalorder %v478, %v1137
        %vm1158 = vcmp.eq.s32.totalorder %v478, %v1140
        %vm1159 = vcmp.eq.s32.totalorder %v478, %v1143
        %v1160 = vsel %vm1144, %v819, 0.0
        %v1161 = vsel %vm1145, %v820, 0.0
        %v1162 = vsel %vm1146, %v821, 0.0
        %v1163 = vsel %vm1147, %v822, 0.0
        %v1164 = vsel %vm1148, %v823, 0.0
        %v1165 = vsel %vm1149, %v824, 0.0
        %v1166 = vsel %vm1150, %v825, 0.0
        %v1167 = vsel %vm1151, %v826, 0.0
        %v1168 = vsel %vm1152, %v827, 0.0
        %v1169 = vsel %vm1153, %v828, 0.0
        %v1170 = vsel %vm1154, %v829, 0.0
        %v1171 = vsel %vm1155, %v830, 0.0
        %v1172 = vsel %vm1156, %v831, 0.0
        %v1173 = vsel %vm1157, %v832, 0.0
        %v1174 = vsel %vm1158, %v833, 0.0
        %v1175 = vsel %vm1159, %v834, 0.0
        %1176 = vadd.xlane.f32.xlu0 %v1160
        %v1177 = vpop.xlane.xlu0 %1176
        %1178 = vadd.xlane.f32.xlu0 %v1161
        %v1179 = vpop.xlane.xlu0 %1178
        %1180 = vadd.xlane.f32.xlu0 %v1162
        %v1181 = vpop.xlane.xlu0 %1180
        %1182 = vadd.xlane.f32.xlu0 %v1163
        %v1183 = vpop.xlane.xlu0 %1182
        %1184 = vadd.xlane.f32.xlu0 %v1164
        %v1185 = vpop.xlane.xlu0 %1184
        %1186 = vadd.xlane.f32.xlu0 %v1165
        %v1187 = vpop.xlane.xlu0 %1186
        %1188 = vadd.xlane.f32.xlu0 %v1166
        %v1189 = vpop.xlane.xlu0 %1188
        %1190 = vadd.xlane.f32.xlu0 %v1167
        %v1191 = vpop.xlane.xlu0 %1190
        %1192 = vadd.xlane.f32.xlu0 %v1168
        %v1193 = vpop.xlane.xlu0 %1192
        %1194 = vadd.xlane.f32.xlu0 %v1169
        %v1195 = vpop.xlane.xlu0 %1194
        %1196 = vadd.xlane.f32.xlu0 %v1170
        %v1197 = vpop.xlane.xlu0 %1196
        %1198 = vadd.xlane.f32.xlu0 %v1171
        %v1199 = vpop.xlane.xlu0 %1198
        %1200 = vadd.xlane.f32.xlu0 %v1172
        %v1201 = vpop.xlane.xlu0 %1200
        %1202 = vadd.xlane.f32.xlu0 %v1173
        %v1203 = vpop.xlane.xlu0 %1202
        %1204 = vadd.xlane.f32.xlu0 %v1174
        %v1205 = vpop.xlane.xlu0 %1204
        %1206 = vadd.xlane.f32.xlu0 %v1175
        %v1207 = vpop.xlane.xlu0 %1206
        %v1208 = vsub.f32 %v1064, %v1177
        %v1209 = vsub.f32 %v1065, %v1179
        %v1210 = vsub.f32 %v1066, %v1181
        %v1211 = vsub.f32 %v1067, %v1183
        %v1212 = vsub.f32 %v1068, %v1185
        %v1213 = vsub.f32 %v1069, %v1187
        %v1214 = vsub.f32 %v1070, %v1189
        %v1215 = vsub.f32 %v1071, %v1191
        %v1216 = vsub.f32 %v1072, %v1193
        %v1217 = vsub.f32 %v1073, %v1195
        %v1218 = vsub.f32 %v1074, %v1197
        %v1219 = vsub.f32 %v1075, %v1199
        %v1220 = vsub.f32 %v1076, %v1201
        %v1221 = vsub.f32 %v1077, %v1203
        %v1222 = vsub.f32 %v1078, %v1205
        %v1223 = vsub.f32 %v1079, %v1207
        %v1224 = vmul.f32 %v1208, %v904
        %v1225 = vmul.f32 %v1209, %v905
        %v1226 = vmul.f32 %v1210, %v906
        %v1227 = vmul.f32 %v1211, %v907
        %v1228 = vmul.f32 %v1212, %v908
        %v1229 = vmul.f32 %v1213, %v909
        %v1230 = vmul.f32 %v1214, %v910
        %v1231 = vmul.f32 %v1215, %v911
        %v1232 = vmul.f32 %v1216, %v912
        %v1233 = vmul.f32 %v1217, %v913
        %v1234 = vmul.f32 %v1218, %v914
        %v1235 = vmul.f32 %v1219, %v915
        %v1236 = vmul.f32 %v1220, %v916
        %v1237 = vmul.f32 %v1221, %v917
        %v1238 = vmul.f32 %v1222, %v918
        %v1239 = vmul.f32 %v1223, %v919
        %v1240 = vld [vmem:[#allocation2] sm:$0x1]
        %vm1241 = vcmask 7168
        %v1242 = vsel %vm1241, %v1224, 0.0
        %v1243 = vsel %vm1241, %v1225, 0.0
        %v1244 = vadd.f32 %v1242, %v1243
        %v1245 = vsel %vm1241, %v1226, 0.0
        %v1246 = vadd.f32 %v1244, %v1245
        %v1247 = vsel %vm1241, %v1227, 0.0
        %v1248 = vadd.f32 %v1246, %v1247
        %v1249 = vsel %vm1241, %v1228, 0.0
        %v1250 = vadd.f32 %v1248, %v1249
        %v1251 = vsel %vm1241, %v1229, 0.0
        %v1252 = vadd.f32 %v1250, %v1251
        %v1253 = vsel %vm1241, %v1230, 0.0
        %v1254 = vadd.f32 %v1252, %v1253
        %v1255 = vsel %vm1241, %v1231, 0.0
        %v1256 = vadd.f32 %v1254, %v1255
        %v1257 = vsel %vm1241, %v1232, 0.0
        %v1258 = vadd.f32 %v1256, %v1257
        %v1259 = vsel %vm1241, %v1233, 0.0
        %v1260 = vadd.f32 %v1258, %v1259
        %v1261 = vsel %vm1241, %v1234, 0.0
        %v1262 = vadd.f32 %v1260, %v1261
        %v1263 = vsel %vm1241, %v1235, 0.0
        %v1264 = vadd.f32 %v1262, %v1263
        %v1265 = vsel %vm1241, %v1236, 0.0
        %v1266 = vadd.f32 %v1264, %v1265
        %v1267 = vsel %vm1241, %v1237, 0.0
        %v1268 = vadd.f32 %v1266, %v1267
        %v1269 = vsel %vm1241, %v1238, 0.0
        %v1270 = vadd.f32 %v1268, %v1269
        %v1271 = vsel %vm1241, %v1239, 0.0
        %v1272 = vadd.f32 %v1270, %v1271
        %1273 = vadd.xlane.f32.xlu0 %v1272
        %v1274 = vpop.xlane.xlu0 %1273
        %v1275 = vrot.slane %v1274, 4
        %v1276 = vadd.f32 %v1274, %v1275
        %v1277 = vrot.slane %v1276, 2
        %v1278 = vadd.f32 %v1276, %v1277
        %v1279 = vrot.slane %v1278, 1
        %v1280 = vadd.f32 %v1278, %v1279
        %s1281 = vtos %v1280
        %v1282 = vstv %s1281
        %v1283 = vadd.f32 %v1240, %v1282
        %vm1284 = vcmask 0
        %1285 = vst.msk [vmem:[#allocation2] sm:$0x1] %vm1284, %v1283
        %v1286 = vld [vmem:[#allocation3] sm:$0x1]
        %v1287 = vsel %vm1241, %v904, 0.0
        %v1288 = vsel %vm1241, %v905, 0.0
        %v1289 = vadd.f32 %v1287, %v1288
        %v1290 = vsel %vm1241, %v906, 0.0
        %v1291 = vadd.f32 %v1289, %v1290
        %v1292 = vsel %vm1241, %v907, 0.0
        %v1293 = vadd.f32 %v1291, %v1292
        %v1294 = vsel %vm1241, %v908, 0.0
        %v1295 = vadd.f32 %v1293, %v1294
        %v1296 = vsel %vm1241, %v909, 0.0
        %v1297 = vadd.f32 %v1295, %v1296
        %v1298 = vsel %vm1241, %v910, 0.0
        %v1299 = vadd.f32 %v1297, %v1298
        %v1300 = vsel %vm1241, %v911, 0.0
        %v1301 = vadd.f32 %v1299, %v1300
        %v1302 = vsel %vm1241, %v912, 0.0
        %v1303 = vadd.f32 %v1301, %v1302
        %v1304 = vsel %vm1241, %v913, 0.0
        %v1305 = vadd.f32 %v1303, %v1304
        %v1306 = vsel %vm1241, %v914, 0.0
        %v1307 = vadd.f32 %v1305, %v1306
        %v1308 = vsel %vm1241, %v915, 0.0
        %v1309 = vadd.f32 %v1307, %v1308
        %v1310 = vsel %vm1241, %v916, 0.0
        %v1311 = vadd.f32 %v1309, %v1310
        %v1312 = vsel %vm1241, %v917, 0.0
        %v1313 = vadd.f32 %v1311, %v1312
        %v1314 = vsel %vm1241, %v918, 0.0
        %v1315 = vadd.f32 %v1313, %v1314
        %v1316 = vsel %vm1241, %v919, 0.0
        %v1317 = vadd.f32 %v1315, %v1316
        %1318 = vadd.xlane.f32.xlu0 %v1317
        %v1319 = vpop.xlane.xlu0 %1318
        %v1320 = vrot.slane %v1319, 4
        %v1321 = vadd.f32 %v1319, %v1320
        %v1322 = vrot.slane %v1321, 2
        %v1323 = vadd.f32 %v1321, %v1322
        %v1324 = vrot.slane %v1323, 1
        %v1325 = vadd.f32 %v1323, %v1324
        %s1326 = vtos %v1325
        %v1327 = vstv %s1326
        %v1328 = vadd.f32 %v1286, %v1327
        %1329 = vst.msk [vmem:[#allocation3] sm:$0x1] %vm1284, %v1328
        %p1330 = scmp.eq.s32.totalorder %s19, 1
        // Predicated region
        $region45: #{tpu_custom_call.1} parent=39 // pred_check
          %p1331 = pneg %p1330
        $region46: #{tpu_custom_call.1} parent=39 // pred_check_branch
          %1333 = sbr.rel (%p1331) target = $region48
        $region47: #{tpu_custom_call.1} parent=39 // pred_region
          %v1334 = vld [vmem:[#allocation2] sm:$0x1]
          %v1335 = vld [vmem:[#allocation3] sm:$0x1]
          %v1336 = vmax.f32 %v1335, 1.0
          %v1337 = vrcp.pop %v1336
          %v1338 = vmul.f32 %v1334, %v1337
          %s1339 = vtos %v1338
          %s1340 = scalar_lea.smem [#allocation6], 0
          %1341 = sst [smem:[%s1340]] %s1339
        $region48: #{tpu_custom_call.1} parent=39 // pred_fallthru
          _
        // Predicated region
        $region49: #{tpu_custom_call.1} parent=39 // pred_check
          %p1342 = pneg %p152
        $region50: #{tpu_custom_call.1} parent=39 // pred_check_branch
          %1344 = sbr.rel (%p1342) target = $region52
        $region51: #{tpu_custom_call.1} parent=39 // pred_region
          %s1346 = ssub.s32 16, 16
          %1347 = vsyncadd [#allocation7], %s1346
          %1350 = dma.smem_to_hbm [#allocation6], 16, %s6, [#allocation7]
        $region52: #{tpu_custom_call.1} parent=39 // pred_fallthru
          _
        // Predicated region
        $region53: #{tpu_custom_call.1} parent=39 // pred_check
          %p1351 = pneg %p152
        $region54: #{tpu_custom_call.1} parent=39 // pred_check_branch
          %1353 = sbr.rel (%p1351) target = $region56
        $region55: #{tpu_custom_call.1} parent=39 // pred_region
          %1354 = dma.done [#allocation7], 16
        $region56: #{tpu_custom_call.1} parent=39 // pred_fallthru
          _
        %1355 = sfence
      $region40: #{tpu_custom_call.1} parent=5 // pred_fallthru
        _
      %p1356 = scmp.le.s32.totalorder 2, %s14
      // Predicated region
      $region57: #{tpu_custom_call.1} parent=5 // pred_check
        %p1357 = pneg %p1356
      $region58: #{tpu_custom_call.1} parent=5 // pred_check_branch
        %1359 = sbr.rel (%p1357) target = $region60
      $region59: #{tpu_custom_call.1} parent=5 // pred_region
        %s1360 = ssub.s32 %s14, 2
      $region60: #{tpu_custom_call.1} parent=5 // pred_fallthru
        _
    $region6: #{tpu_custom_call.1} parent=1 // loop_footer
      %s18 = sadd.s32 1, %s14
    $region7: #{tpu_custom_call.1} parent=1 // loop_footer_branch
      %13 = sbr.rel target = $region3
    $region8: #{tpu_custom_call.1} parent=1 // loop_exit
      _
    %1361 = vsyncpa [#allocation7], 1
    %s1362 = scalar_lea.sflag [#allocation7], 1
    %1363 = vsyncpa %s1362, 1

</llo_original>
